<compile_context>
chip_gen: v6e
topology: v6e:2x2x1
jax: 0.10.0
libtpu: 0.0.40
codegen_flags: <defaults>
</compile_context>

<pallas_src>
import functools

import numpy as np
import jax
import jax.numpy as jnp
from jax import lax
from jax.experimental import pallas as pl
from jax.experimental.pallas import tpu as pltpu


# Contraction patterns for lax.dot_general (same forms the TPU flash-attention
# kernels use; no double-transposed matmuls, no explicit XLU transposes).
_TN = (((0,), (0,)), ((), ()))   # A^T @ B : contract the sublane dim of both
_NT = (((1,), (1,)), ((), ()))   # A @ B^T : contract the lane dim of both


def _graph_attention_kernel(use_bf16, gamma_ref, xf_ref, xt_ref,
                            wq_ref, bq_ref, wk_ref, bk_ref, wv_ref, bv_ref,
                            mask_ref, o_ref):
    f32 = jnp.float32

    x_all = xf_ref[0]     # (C, HW)  full image, lane-dense NCHW block (keys/values)
    x_tl = xt_ref[0]      # (C, TQ)  query-pixel columns of the same image (+ residual)

    # 1x1-conv projections with the channel transpose folded into dot_general
    # (contract C directly from the (C, HW) layout -- no materialized (HW, C)
    # copy).  q/k land in compact (Cq, *) vregs; v lands directly in (C, HW) so
    # the epilogue needs no relayout.
    q = lax.dot_general(wq_ref[...], x_tl, _TN, preferred_element_type=f32) + bq_ref[...]    # (Cq, TQ)
    k = lax.dot_general(wk_ref[...], x_all, _TN, preferred_element_type=f32) + bk_ref[...]   # (Cq, HW)
    v = lax.dot_general(wv_ref[...], x_all, _TN, preferred_element_type=f32) + bv_ref[...]   # (C,  HW)

    if use_bf16:
        # bf16 MXU operands (~2x MXU throughput on v6e/v7x); accumulation and
        # all softmax/elementwise math stay in f32.
        q = q.astype(jnp.bfloat16)
        k = k.astype(jnp.bfloat16)
        v = v.astype(jnp.bfloat16)

    # Dense criss-cross attention: one energy matmul over ALL HW keys, plus a
    # precomputed additive mask (0 inside the row/column cross, -1e30 outside).
    # The centre pixel lies inside the cross exactly once, matching the CUDA
    # kernel (counted in the row part, skipped in the column part).
    e = lax.dot_general(q, k, _TN, preferred_element_type=f32) + mask_ref[...]   # (TQ, HW)

    # Softmax over the HW keys: every reduction runs along the 128-lane axis,
    # all math in f32.  Masked entries underflow cleanly to 0 (no NaN).
    m = jnp.max(e, axis=-1, keepdims=True)                    # (TQ, 1)
    p = jnp.exp(e - m)                                        # (TQ, HW)
    denom = jnp.sum(p, axis=-1, keepdims=True)                # (TQ, 1)
    inv = pl.reciprocal(denom, approx=True)                   # EUP slot
    inv = inv * (2.0 - denom * inv)                           # one Newton step -> ~fp32 exact
    attn = p * inv                                            # (TQ, HW)
    if use_bf16:
        attn = attn.astype(jnp.bfloat16)

    # Value aggregation straight into the (C, TQ) NCHW layout:
    #   out[c, p] = sum_j v[c, j] * attn[p, j]   (no output transpose).
    out_ct = lax.dot_general(v, attn, _NT, preferred_element_type=f32)   # (C, TQ)

    gamma = gamma_ref[0]
    o_ref[0] = (gamma * out_ct + x_tl).astype(o_ref.dtype)


def _pick_query_tile(HW):
    # Lane-dense output blocks (multiple of 128) when possible; otherwise a
    # single block covering the whole (small) spatial extent.
    if HW % 128 != 0:
        return HW
    for cand in (512, 256, 128):
        if HW % cand == 0:
            return cand
    return 128


def graph_attention(x_nchw, wq, bq, wk, bk, wv, bv, gamma, *, use_bf16_matmul=True):
    """x_nchw: (N, C, H, W). wq/wk: (C, C//8), wv: (C, C), b*: (1, Cout), gamma: (1,)."""
    N, C, H, W = x_nchw.shape
    Cq = wq.shape[1]
    HW = H * W
    TQ = _pick_query_tile(HW)
    num_qb = HW // TQ

    # NCHW stays in HBM: (N, C, H, W) -> (N, C, H*W) is a free reshape and gives
    # lane-dense input/output blocks; no wrapper-side transposes.
    x_flat = x_nchw.reshape(N, C, HW)

    # Additive criss-cross mask: pixel p attends to pixel j iff same row OR same
    # column (H + W - 1 neighbours, centre counted once).  Precomputed once and
    # DMA'd per query tile -- no per-step iota/compare work on the VPU.
    # TODO(synk): for production CCNet resolutions (H*W >> ~2K) the dense HW x HW
    # mask/energy no longer fits; switch to a tiled criss-cross form with
    # resident k/v (flash-style) there.
    pix = jnp.arange(HW, dtype=jnp.int32)
    same_row = (pix[:, None] // W) == (pix[None, :] // W)
    same_col = (pix[:, None] % W) == (pix[None, :] % W)
    mask = jnp.where(same_row | same_col, 0.0, -1e30).astype(jnp.float32)   # (HW, HW)

    f32 = jnp.float32
    wq_ = wq.astype(f32)
    wk_ = wk.astype(f32)
    wv_ = wv.astype(f32)
    bq_ = jnp.reshape(bq, (Cq, 1)).astype(f32)       # column biases: broadcast over lanes
    bk_ = jnp.reshape(bk, (Cq, 1)).astype(f32)
    bv_ = jnp.reshape(bv, (C, 1)).astype(f32)
    gamma_ = jnp.reshape(gamma, (1,)).astype(f32)

    # VMEM request sized from the actual (double-buffered) blocks + temporaries,
    # clamped well below v7x's 64 MiB per-core VMEM.
    io_bytes = 4 * (C * HW + 2 * C * TQ + TQ * HW + 2 * C * Cq + C * C + 2 * Cq + C)
    vmem_limit = int(min(48 * 1024 * 1024, max(8 * 1024 * 1024, 8 * io_bytes)))

    flops = 2 * N * (num_qb * HW * C * (Cq + C)   # k/v projections (recomputed per query tile)
                     + HW * C * Cq                # q projection (over all pixels in total)
                     + HW * HW * (Cq + C))        # dense energy + value aggregation
    ce = pl.CostEstimate(
        flops=int(flops),
        transcendentals=int(N * HW * HW),
        bytes_accessed=int(4 * (2 * N * C * HW + N * num_qb * TQ * HW
                                + 2 * C * Cq + C * C + 2 * Cq + C)),
    )

    kernel = functools.partial(_graph_attention_kernel, use_bf16_matmul)
    out = pl.pallas_call(
        kernel,
        out_shape=jax.ShapeDtypeStruct((N, C, HW), x_nchw.dtype),
        grid=(N, num_qb),
        in_specs=[
            pl.BlockSpec(memory_space=pltpu.MemorySpace.SMEM),      # gamma (scalar)
            pl.BlockSpec((1, C, HW), lambda n, q: (n, 0, 0)),       # x, full image (keys/values)
            pl.BlockSpec((1, C, TQ), lambda n, q: (n, 0, q)),       # x, query-pixel tile (+ residual)
            pl.BlockSpec((C, Cq), lambda n, q: (0, 0)),             # wq
            pl.BlockSpec((Cq, 1), lambda n, q: (0, 0)),             # bq
            pl.BlockSpec((C, Cq), lambda n, q: (0, 0)),             # wk
            pl.BlockSpec((Cq, 1), lambda n, q: (0, 0)),             # bk
            pl.BlockSpec((C, C), lambda n, q: (0, 0)),              # wv
            pl.BlockSpec((C, 1), lambda n, q: (0, 0)),              # bv
            pl.BlockSpec((TQ, HW), lambda n, q: (q, 0)),            # criss-cross mask rows
        ],
        out_specs=pl.BlockSpec((1, C, TQ), lambda n, q: (n, 0, q)),
        compiler_params=pltpu.CompilerParams(
            dimension_semantics=("parallel", "parallel"),
            vmem_limit_bytes=vmem_limit,
        ),
        cost_estimate=ce,
    )(gamma_, x_flat, x_flat, wq_, bq_, wk_, bk_, wv_, bv_, mask)

    return out.reshape(N, C, H, W)


# ----------------------- pure-JAX reference (for verification) -----------------
def _ca_weight_ref(t, f):
    # t, f: (N, C, H, W)  ->  (N, H+W-1, H, W), matching the CUDA layout.
    N, C, H, W = t.shape
    w_row = jnp.einsum('ncyx,ncyu->nuyx', t, f)        # (N, W, H, W)
    w_col = jnp.einsum('ncyx,ncix->niyx', t, f)        # (N, H, H, W)
    j = jnp.arange(H - 1)
    y = jnp.arange(H)
    idx = jnp.where(j[None, :] < y[:, None], j[None, :], j[None, :] + 1)  # (H, H-1)
    w_col_y = jnp.transpose(w_col, (0, 2, 1, 3))       # (N, y, i, x)
    w_col_sel = jnp.take_along_axis(w_col_y, idx[None, :, :, None], axis=2)
    w_col_sel = jnp.transpose(w_col_sel, (0, 2, 1, 3))  # (N, H-1, H, W)
    return jnp.concatenate([w_row, w_col_sel], axis=1)


def _ca_map_ref(attn, g):
    N, C, H, W = g.shape
    a_row = attn[:, :W]                                # (N, W, H, W)
    a_col = attn[:, W:]                                # (N, H-1, H, W)
    out_row = jnp.einsum('nuyx,ncyu->ncyx', a_row, g)
    j = jnp.arange(H - 1)
    y = jnp.arange(H)
    idx = jnp.where(j[None, :] < y[:, None], j[None, :], j[None, :] + 1)  # (H, H-1)
    g_sel = g[:, :, idx, :]                            # (N, C, H, H-1, W)
    out_col = jnp.einsum('njyx,ncyjx->ncyx', a_col, g_sel)
    return out_row + out_col


def reference(x, wq, bq, wk, bk, wv, bv, gamma):
    def conv1x1(x, w, b):
        return jnp.einsum('nchw,cd->ndhw', x, w) + b[None, :, None, None]
    q = conv1x1(x, wq, bq)
    k = conv1x1(x, wk, bk)
    v = conv1x1(x, wv, bv)
    energy = _ca_weight_ref(q, k)
    attn = jax.nn.softmax(energy, axis=1)
    out = _ca_map_ref(attn, v)
    return gamma * out + x


if __name__ == "__main__":
    key = jax.random.PRNGKey(0)
    N, C, H, W = 2, 64, 8, 16                 # feature_size = 64 -> q/k channels = 8
    Cq = C // 8
    ks = jax.random.split(key, 7)

    x = jax.random.normal(ks[0], (N, C, H, W), jnp.float32)
    wq = 0.1 * jax.random.normal(ks[1], (C, Cq), jnp.float32)
    bq = 0.1 * jax.random.normal(ks[2], (1, Cq), jnp.float32)
    wk = 0.1 * jax.random.normal(ks[3], (C, Cq), jnp.float32)
    bk = 0.1 * jax.random.normal(ks[4], (1, Cq), jnp.float32)
    wv = 0.1 * jax.random.normal(ks[5], (C, C), jnp.float32)
    bv = 0.1 * jax.random.normal(ks[6], (1, C), jnp.float32)
    # The module initializes gamma to 0 (output == x); use a nonzero value here
    # so the attention path is actually exercised/verified.
    gamma = jnp.array([0.5], jnp.float32)

    ref = reference(x, wq, bq[0], wk, bk[0], wv, bv[0], gamma[0])

    # f32 MXU operands: tight check of the kernel structure / mask / softmax.
    out_f32 = jax.block_until_ready(
        graph_attention(x, wq, bq, wk, bk, wv, bv, gamma, use_bf16_matmul=False))
    assert out_f32.shape == x.shape and out_f32.dtype == x.dtype
    np.testing.assert_allclose(np.asarray(out_f32), np.asarray(ref), rtol=2e-4, atol=2e-4)

    # bf16 MXU operands (default fast path for v6e/v7x): looser tolerance from
    # bf16 rounding of q/k/v/attn; softmax math and accumulation stay in f32.
    out_bf16 = jax.block_until_ready(
        graph_attention(x, wq, bq, wk, bk, wv, bv, gamma, use_bf16_matmul=True))
    assert out_bf16.shape == x.shape and out_bf16.dtype == x.dtype
    np.testing.assert_allclose(np.asarray(out_bf16), np.asarray(ref), rtol=3e-2, atol=3e-2)

    print("KERNEL_OK")
</pallas_src>

<mosaic_0001>
module attributes {stable_mosaic.version = 11 : i64} {
  func.func @_graph_attention_kernel(%arg0: i32, %arg1: i32, %arg2: memref<1xf32, #tpu.memory_space<smem>>, %arg3: memref<1x64x128xf32, #tpu.memory_space<vmem>>, %arg4: memref<1x64x128xf32, #tpu.memory_space<vmem>>, %arg5: memref<64x8xf32, #tpu.memory_space<vmem>>, %arg6: memref<8x1xf32, #tpu.memory_space<vmem>>, %arg7: memref<64x8xf32, #tpu.memory_space<vmem>>, %arg8: memref<8x1xf32, #tpu.memory_space<vmem>>, %arg9: memref<64x64xf32, #tpu.memory_space<vmem>>, %arg10: memref<64x1xf32, #tpu.memory_space<vmem>>, %arg11: memref<128x128xf32, #tpu.memory_space<vmem>>, %arg12: memref<1x64x128xf32, #tpu.memory_space<vmem>>) attributes {dimension_semantics = [#tpu.dimension_semantics<parallel>, #tpu.dimension_semantics<parallel>], iteration_bounds = array<i64: 2, 1>, scalar_prefetch = 0 : i64, scratch_operands = 0 : i64, tpu.core_type = #tpu.core_type<tc>, window_params = [{transform_indices = @transform_0, window_bounds = array<i64: 1>}, {transform_indices = @transform_1, window_bounds = array<i64: 1, 64, 128>}, {transform_indices = @transform_2, window_bounds = array<i64: 1, 64, 128>}, {pipeline_mode = #tpu.pipeline_mode<synchronous>, transform_indices = @transform_3, window_bounds = array<i64: 64, 8>}, {pipeline_mode = #tpu.pipeline_mode<synchronous>, transform_indices = @transform_4, window_bounds = array<i64: 8, 1>}, {pipeline_mode = #tpu.pipeline_mode<synchronous>, transform_indices = @transform_5, window_bounds = array<i64: 64, 8>}, {pipeline_mode = #tpu.pipeline_mode<synchronous>, transform_indices = @transform_6, window_bounds = array<i64: 8, 1>}, {pipeline_mode = #tpu.pipeline_mode<synchronous>, transform_indices = @transform_7, window_bounds = array<i64: 64, 64>}, {pipeline_mode = #tpu.pipeline_mode<synchronous>, transform_indices = @transform_8, window_bounds = array<i64: 64, 1>}, {transform_indices = @transform_9, window_bounds = array<i64: 128, 128>}, {transform_indices = @transform_10, window_bounds = array<i64: 1, 64, 128>}]} {
    %c0 = arith.constant 0 : index
    %c0_0 = arith.constant 0 : index
    %c0_1 = arith.constant 0 : index
    %0 = vector.load %arg3[%c0, %c0_0, %c0_1] : memref<1x64x128xf32, #tpu.memory_space<vmem>>, vector<1x64x128xf32>
    %1 = vector.shape_cast %0 : vector<1x64x128xf32> to vector<64x128xf32>
    %c0_2 = arith.constant 0 : index
    %c0_3 = arith.constant 0 : index
    %c0_4 = arith.constant 0 : index
    %2 = vector.load %arg4[%c0_2, %c0_3, %c0_4] : memref<1x64x128xf32, #tpu.memory_space<vmem>>, vector<1x64x128xf32>
    %3 = vector.shape_cast %2 : vector<1x64x128xf32> to vector<64x128xf32>
    %c0_5 = arith.constant 0 : index
    %c0_6 = arith.constant 0 : index
    %4 = vector.load %arg5[%c0_5, %c0_6] : memref<64x8xf32, #tpu.memory_space<vmem>>, vector<64x8xf32>
    %cst = arith.constant dense<0.000000e+00> : vector<8x128xf32>
    %5 = tpu.matmul %4, %3, %cst {dimension_numbers = #tpu.dot_dimension_numbers<[0], [0], [1], [1], [0, 1, 1, 1], [], []>} : vector<64x8xf32>, vector<64x128xf32>, vector<8x128xf32> -> vector<8x128xf32>
    %c0_7 = arith.constant 0 : index
    %c0_8 = arith.constant 0 : index
    %6 = vector.load %arg6[%c0_7, %c0_8] : memref<8x1xf32, #tpu.memory_space<vmem>>, vector<8x1xf32>
    %7 = vector.broadcast %6 : vector<8x1xf32> to vector<8x128xf32>
    %8 = arith.addf %5, %7 : vector<8x128xf32>
    %c0_9 = arith.constant 0 : index
    %c0_10 = arith.constant 0 : index
    %9 = vector.load %arg7[%c0_9, %c0_10] : memref<64x8xf32, #tpu.memory_space<vmem>>, vector<64x8xf32>
    %cst_11 = arith.constant dense<0.000000e+00> : vector<8x128xf32>
    %10 = tpu.matmul %9, %1, %cst_11 {dimension_numbers = #tpu.dot_dimension_numbers<[0], [0], [1], [1], [0, 1, 1, 1], [], []>} : vector<64x8xf32>, vector<64x128xf32>, vector<8x128xf32> -> vector<8x128xf32>
    %c0_12 = arith.constant 0 : index
    %c0_13 = arith.constant 0 : index
    %11 = vector.load %arg8[%c0_12, %c0_13] : memref<8x1xf32, #tpu.memory_space<vmem>>, vector<8x1xf32>
    %12 = vector.broadcast %11 : vector<8x1xf32> to vector<8x128xf32>
    %13 = arith.addf %10, %12 : vector<8x128xf32>
    %c0_14 = arith.constant 0 : index
    %c0_15 = arith.constant 0 : index
    %14 = vector.load %arg9[%c0_14, %c0_15] : memref<64x64xf32, #tpu.memory_space<vmem>>, vector<64x64xf32>
    %cst_16 = arith.constant dense<0.000000e+00> : vector<64x128xf32>
    %15 = tpu.matmul %14, %1, %cst_16 {dimension_numbers = #tpu.dot_dimension_numbers<[0], [0], [1], [1], [0, 1, 1, 1], [], []>} : vector<64x64xf32>, vector<64x128xf32>, vector<64x128xf32> -> vector<64x128xf32>
    %c0_17 = arith.constant 0 : index
    %c0_18 = arith.constant 0 : index
    %16 = vector.load %arg10[%c0_17, %c0_18] : memref<64x1xf32, #tpu.memory_space<vmem>>, vector<64x1xf32>
    %17 = vector.broadcast %16 : vector<64x1xf32> to vector<64x128xf32>
    %18 = arith.addf %15, %17 : vector<64x128xf32>
    %cst_19 = arith.constant dense<0.000000e+00> : vector<128x128xf32>
    %19 = tpu.matmul %8, %13, %cst_19 {dimension_numbers = #tpu.dot_dimension_numbers<[0], [0], [1], [1], [0, 1, 1, 1], [], []>} : vector<8x128xf32>, vector<8x128xf32>, vector<128x128xf32> -> vector<128x128xf32>
    %c0_20 = arith.constant 0 : index
    %c0_21 = arith.constant 0 : index
    %20 = vector.load %arg11[%c0_20, %c0_21] : memref<128x128xf32, #tpu.memory_space<vmem>>, vector<128x128xf32>
    %21 = arith.addf %19, %20 : vector<128x128xf32>
    %cst_22 = arith.constant dense<0xFF800000> : vector<128xf32>
    %22 = vector.multi_reduction <maximumf>, %21, %cst_22 [1] : vector<128x128xf32> to vector<128xf32>
    %23 = vector.shape_cast %22 : vector<128xf32> to vector<128x1xf32>
    %24 = vector.broadcast %23 : vector<128x1xf32> to vector<128x128xf32>
    %25 = arith.subf %21, %24 : vector<128x128xf32>
    %26 = math.exp %25 : vector<128x128xf32>
    %cst_23 = arith.constant dense<0.000000e+00> : vector<128xf32>
    %27 = vector.multi_reduction <add>, %26, %cst_23 [1] : vector<128x128xf32> to vector<128xf32>
    %28 = vector.shape_cast %27 : vector<128xf32> to vector<128x1xf32>
    %29 = tpu.reciprocal %28 {approx = true} : vector<128x1xf32> -> vector<128x1xf32>
    %30 = arith.mulf %28, %29 : vector<128x1xf32>
    %cst_24 = arith.constant 2.000000e+00 : f32
    %31 = vector.broadcast %cst_24 : f32 to vector<128x1xf32>
    %32 = arith.subf %31, %30 : vector<128x1xf32>
    %33 = arith.mulf %29, %32 : vector<128x1xf32>
    %34 = vector.broadcast %33 : vector<128x1xf32> to vector<128x128xf32>
    %35 = arith.mulf %26, %34 : vector<128x128xf32>
    %cst_25 = arith.constant dense<0.000000e+00> : vector<64x128xf32>
    %36 = tpu.matmul %18, %35, %cst_25 {dimension_numbers = #tpu.dot_dimension_numbers<[1], [1], [0], [0], [0, 0, 1, 0], [], []>} : vector<64x128xf32>, vector<128x128xf32>, vector<64x128xf32> -> vector<64x128xf32>
    %c0_26 = arith.constant 0 : index
    %37 = memref.load %arg2[%c0_26] : memref<1xf32, #tpu.memory_space<smem>>
    %38 = vector.broadcast %37 : f32 to vector<64x128xf32>
    %39 = arith.mulf %38, %36 : vector<64x128xf32>
    %40 = arith.addf %39, %3 : vector<64x128xf32>
    %c0_27 = arith.constant 0 : index
    %c0_28 = arith.constant 0 : index
    %c0_29 = arith.constant 0 : index
    %41 = vector.load %arg12[%c0_27, %c0_28, %c0_29] : memref<1x64x128xf32, #tpu.memory_space<vmem>>, vector<1x64x128xf32>
    %42 = vector.shape_cast %41 : vector<1x64x128xf32> to vector<64x128xf32>
    %43 = vector.shape_cast %40 : vector<64x128xf32> to vector<1x64x128xf32>
    tpu.vector_store %arg12[%c0_27, %c0_28, %c0_29], %43 {strides = array<i32>} : memref<1x64x128xf32, #tpu.memory_space<vmem>>, vector<1x64x128xf32>,
    return
  }
  func.func @transform_0(%arg0: i32, %arg1: i32) -> i32 {
    %c0_i32 = arith.constant 0 : i32
    %c0_i32_0 = arith.constant 0 : i32
    return %c0_i32 : i32
  }
  func.func @transform_1(%arg0: i32, %arg1: i32) -> (i32, i32, i32) {
    %c0_i32 = arith.constant 0 : i32
    %c0_i32_0 = arith.constant 0 : i32
    %c0_i32_1 = arith.constant 0 : i32
    return %arg0, %c0_i32, %c0_i32_0 : i32, i32, i32
  }
  func.func @transform_2(%arg0: i32, %arg1: i32) -> (i32, i32, i32) {
    %c0_i32 = arith.constant 0 : i32
    %c0_i32_0 = arith.constant 0 : i32
    return %arg0, %c0_i32, %arg1 : i32, i32, i32
  }
  func.func @transform_3(%arg0: i32, %arg1: i32) -> (i32, i32) {
    %c0_i32 = arith.constant 0 : i32
    %c0_i32_0 = arith.constant 0 : i32
    %c0_i32_1 = arith.constant 0 : i32
    return %c0_i32, %c0_i32_0 : i32, i32
  }
  func.func @transform_4(%arg0: i32, %arg1: i32) -> (i32, i32) {
    %c0_i32 = arith.constant 0 : i32
    %c0_i32_0 = arith.constant 0 : i32
    %c0_i32_1 = arith.constant 0 : i32
    return %c0_i32, %c0_i32_0 : i32, i32
  }
  func.func @transform_5(%arg0: i32, %arg1: i32) -> (i32, i32) {
    %c0_i32 = arith.constant 0 : i32
    %c0_i32_0 = arith.constant 0 : i32
    %c0_i32_1 = arith.constant 0 : i32
    return %c0_i32, %c0_i32_0 : i32, i32
  }
  func.func @transform_6(%arg0: i32, %arg1: i32) -> (i32, i32) {
    %c0_i32 = arith.constant 0 : i32
    %c0_i32_0 = arith.constant 0 : i32
    %c0_i32_1 = arith.constant 0 : i32
    return %c0_i32, %c0_i32_0 : i32, i32
  }
  func.func @transform_7(%arg0: i32, %arg1: i32) -> (i32, i32) {
    %c0_i32 = arith.constant 0 : i32
    %c0_i32_0 = arith.constant 0 : i32
    %c0_i32_1 = arith.constant 0 : i32
    return %c0_i32, %c0_i32_0 : i32, i32
  }
  func.func @transform_8(%arg0: i32, %arg1: i32) -> (i32, i32) {
    %c0_i32 = arith.constant 0 : i32
    %c0_i32_0 = arith.constant 0 : i32
    %c0_i32_1 = arith.constant 0 : i32
    return %c0_i32, %c0_i32_0 : i32, i32
  }
  func.func @transform_9(%arg0: i32, %arg1: i32) -> (i32, i32) {
    %c0_i32 = arith.constant 0 : i32
    %c0_i32_0 = arith.constant 0 : i32
    return %arg1, %c0_i32 : i32, i32
  }
  func.func @transform_10(%arg0: i32, %arg1: i32) -> (i32, i32, i32) {
    %c0_i32 = arith.constant 0 : i32
    %c0_i32_0 = arith.constant 0 : i32
    return %arg0, %c0_i32, %arg1 : i32, i32, i32
  }
}

</mosaic_0001>

<llo_original>
// kernel: tpu_custom_call.1
$region0: #{tpu_custom_call.1}
  #allocation0 [shape = 'u32[]', space=smem, size = 0x4, offset = 0x4, fixed_abs, tag = 'smem constant byte address 0x4 - core index']
  #allocation1 [shape = 'u32[144,128]{1,0:T(1,128)}', space=vmem, size = 0x12000, scoped, tag = 'internal scratch']
  #allocation2 [shape = 'f32[1]{0:T(128)S(6)}', space=smem, size = 0x200, scoped, tag = 'scoped memory for tpu_custom_call.1']
  %s0 = inlined_call_operand.<no memory space> [shape: f32[1], index: 0, kind: input, shape index: {}]
  %s1 = inlined_call_operand.vmem [shape: f32[2,64,128], index: 1, kind: input, shape index: {}]
  %s2 = inlined_call_operand.hbm [shape: f32[2,64,128], index: 2, kind: input, shape index: {}]
  %s3 = inlined_call_operand.vmem [shape: f32[64,8], index: 3, kind: input, shape index: {}]
  %s4 = inlined_call_operand.vmem [shape: f32[8,1], index: 4, kind: input, shape index: {}]
  %s5 = inlined_call_operand.vmem [shape: f32[64,8], index: 5, kind: input, shape index: {}]
  %s6 = inlined_call_operand.vmem [shape: f32[8,1], index: 6, kind: input, shape index: {}]
  %s7 = inlined_call_operand.vmem [shape: f32[64,64], index: 7, kind: input, shape index: {}]
  %s8 = inlined_call_operand.vmem [shape: f32[64,1], index: 8, kind: input, shape index: {}]
  %s9 = inlined_call_operand.hbm [shape: f32[128,128], index: 9, kind: input, shape index: {}]
  %s10 = inlined_call_operand.hbm [shape: f32[2,64,128], index: 10, kind: output, shape index: {}]
  %s11 = sld [smem:[#allocation0]]
  $region81: #{tpu_custom_call.1} parent=0
    _
  %s13 = ssub.s32 1, %s11
  %s14 = scalar_select 0, %s13, %s11
  %15 = sst [smem:[#allocation2]] %s0
  $region1: #{tpu_custom_call.1} parent=0
    #allocation3 [shape = 'u8[65536]{0}', space=vmem, size = 0x10000, scoped, tag = 'input window, operand 2']
    #allocation4 [shape = 's32[2]{0}', space=sflag, size = 0x8, scoped, tag = 'scoped memory for tpu_custom_call.1']
    #allocation5 [shape = 's32[2]{0}', space=sflag, size = 0x8, scoped, tag = 'scoped memory for tpu_custom_call.1']
    #allocation6 [shape = 'u8[65536]{0}', space=vmem, size = 0x10000, scoped, tag = 'input window, operand 9, single buffered']
    #allocation7 [shape = 's32[1]{0}', space=sflag, size = 0x4, scoped, tag = 'scoped memory for tpu_custom_call.1']
    #allocation8 [shape = 'u8[65536]{0}', space=vmem, size = 0x10000, scoped, tag = 'output window, operand 0']
    %16 = vsyncpa [#allocation4], 0
    %s17 = scalar_lea.sflag [#allocation4], 1
    %18 = vsyncpa %s17, 0
    %19 = vsyncpa [#allocation7], 0
    %20 = vsyncpa [#allocation5], 0
    %s21 = scalar_lea.sflag [#allocation5], 1
    %22 = vsyncpa %s21, 0
    loop: start=0, step=1, limit=4
    $region2: #{tpu_custom_call.1} parent=1 // loop_pre_header
      _
    $region3: #{tpu_custom_call.1} parent=1 // loop_header
      %s24 = sphi 0, %s28
      %p25 = scmp.ge.s32.totalorder %s24, 4
      %s31 = sphi 0, %s43
      %s32 = sphi 0, %s39
      %s33 = sphi 0, %s31
      %s34 = sphi 0, %s32
      %s35 = sphi 0, %s33
      %s36 = sphi 0, %s34
      %s44 = sphi 0, %s44
      %s46 = sphi 0, %s44
      %s47 = sphi 0, %s46
      %s61 = sphi 0, %s47
      %s67 = sphi 0, %s69
      %s70 = sphi 0, %s67
      %s71 = sphi 0, %s70
      %s87 = sphi 0, %s71
      %s95 = sphi 0, %s97
      %s98 = sphi 0, %s95
      %s99 = sphi 0, %s98
      %s115 = sphi 0, %s99
      %s119 = sphi 0, %s119
      %s121 = sphi 0, %s119
      %s122 = sphi 0, %s121
      %s136 = sphi 0, %s122
      %s140 = sphi 0, %s140
      %s142 = sphi 0, %s140
      %s143 = sphi 0, %s142
      %s157 = sphi 0, %s143
      %s161 = sphi 0, %s161
      %s163 = sphi 0, %s161
      %s164 = sphi 0, %s163
      %s178 = sphi 0, %s164
      %s182 = sphi 0, %s182
      %s184 = sphi 0, %s182
      %s185 = sphi 0, %s184
      %s199 = sphi 0, %s185
      %s203 = sphi 0, %s203
      %s205 = sphi 0, %s203
      %s206 = sphi 0, %s205
      %s220 = sphi 0, %s206
      %s224 = sphi 0, %s224
      %s226 = sphi 0, %s224
      %s227 = sphi 0, %s226
      %s241 = sphi 0, %s227
      %s247 = sphi 0, %s249
      %s250 = sphi 0, %s247
      %s251 = sphi 0, %s250
      %s267 = sphi 0, %s251
      %s275 = sphi 0, %s277
      %s278 = sphi 0, %s275
      %s279 = sphi 0, %s278
      %s295 = sphi 0, %s279
    $region4: #{tpu_custom_call.1} parent=1 // loop_header_branch
      %27 = sbr.rel (%p25) target = $region8
    $region5: #{tpu_custom_call.1} parent=1 // loop_body
      %s29 = ssub.s32 %s24, 1
      %s30 = ssub.s32 %s24, 2
      %s37 = sadd.s32 1, %s32
      %p38 = scmp.ge.s32.totalorder %s37, 1
      %s39 = scalar_select %p38, 0, %s37
      %s40 = sadd.s32 1, %s31
      %s41 = scalar_select %p38, %s40, %s31
      %p42 = scmp.ge.s32.totalorder %s41, 2
      %s43 = scalar_select %p42, 0, %s41
      %s45 = sadd.s32 %s44, 1
      %p48 = scmp.eq.s32.totalorder %s24, 1
      %p49 = scmp.ne.s32.totalorder %s44, %s46
      %p50 = scmp.eq.s32.totalorder %s24, 0
      %p51 = por %p49, %p50
      %p52 = scmp.ne.s32.totalorder %s44, %s46
      %p53 = scmp.eq.s32.totalorder %s29, 1
      %p54 = por %p52, %p53
      %p55 = scmp.ne.s32.totalorder %s46, %s47
      %p56 = scmp.eq.s32.totalorder %s29, 0
      %p57 = por %p55, %p56
      %p58 = scmp.ne.s32.totalorder %s46, %s47
      %p59 = scmp.eq.s32.totalorder %s30, 1
      %p60 = por %p58, %p59
      %p62 = scmp.ne.s32.totalorder %s47, %s61
      %p63 = scmp.eq.s32.totalorder %s30, 0
      %p64 = por %p62, %p63
      %s65 = ssub.s32 %s31, %s43
      %p66 = scmp.eq.s32.totalorder %s65, 0
      %s68 = sadd.s32 %s67, 1
      %s69 = scalar_select %p66, %s67, %s68
      %p72 = pneg %p66
      %p73 = scmp.eq.s32.totalorder %s24, 1
      %p74 = por %p72, %p73
      %p75 = scmp.ne.s32.totalorder %s67, %s70
      %p76 = scmp.eq.s32.totalorder %s24, 0
      %p77 = por %p75, %p76
      %p78 = scmp.ne.s32.totalorder %s67, %s70
      %p79 = scmp.eq.s32.totalorder %s29, 1
      %p80 = por %p78, %p79
      %p81 = scmp.ne.s32.totalorder %s70, %s71
      %p82 = scmp.eq.s32.totalorder %s29, 0
      %p83 = por %p81, %p82
      %p84 = scmp.ne.s32.totalorder %s70, %s71
      %p85 = scmp.eq.s32.totalorder %s30, 1
      %p86 = por %p84, %p85
      %p88 = scmp.ne.s32.totalorder %s71, %s87
      %p89 = scmp.eq.s32.totalorder %s30, 0
      %p90 = por %p88, %p89
      %s91 = ssub.s32 %s31, %s43
      %s92 = ssub.s32 %s32, %s39
      %s93 = sor.u32 %s91, %s92
      %p94 = scmp.eq.s32.totalorder %s93, 0
      %s96 = sadd.s32 %s95, 1
      %s97 = scalar_select %p94, %s95, %s96
      %p100 = pneg %p94
      %p101 = scmp.eq.s32.totalorder %s24, 1
      %p102 = por %p100, %p101
      %p103 = scmp.ne.s32.totalorder %s95, %s98
      %p104 = scmp.eq.s32.totalorder %s24, 0
      %p105 = por %p103, %p104
      %p106 = scmp.ne.s32.totalorder %s95, %s98
      %p107 = scmp.eq.s32.totalorder %s29, 1
      %p108 = por %p106, %p107
      %p109 = scmp.ne.s32.totalorder %s98, %s99
      %p110 = scmp.eq.s32.totalorder %s29, 0
      %p111 = por %p109, %p110
      %p112 = scmp.ne.s32.totalorder %s98, %s99
      %p113 = scmp.eq.s32.totalorder %s30, 1
      %p114 = por %p112, %p113
      %p116 = scmp.ne.s32.totalorder %s99, %s115
      %p117 = scmp.eq.s32.totalorder %s30, 0
      %p118 = por %p116, %p117
      %s120 = sadd.s32 %s119, 1
      %p123 = scmp.eq.s32.totalorder %s24, 1
      %p124 = scmp.ne.s32.totalorder %s119, %s121
      %p125 = scmp.eq.s32.totalorder %s24, 0
      %p126 = por %p124, %p125
      %p127 = scmp.ne.s32.totalorder %s119, %s121
      %p128 = scmp.eq.s32.totalorder %s29, 1
      %p129 = por %p127, %p128
      %p130 = scmp.ne.s32.totalorder %s121, %s122
      %p131 = scmp.eq.s32.totalorder %s29, 0
      %p132 = por %p130, %p131
      %p133 = scmp.ne.s32.totalorder %s121, %s122
      %p134 = scmp.eq.s32.totalorder %s30, 1
      %p135 = por %p133, %p134
      %p137 = scmp.ne.s32.totalorder %s122, %s136
      %p138 = scmp.eq.s32.totalorder %s30, 0
      %p139 = por %p137, %p138
      %s141 = sadd.s32 %s140, 1
      %p144 = scmp.eq.s32.totalorder %s24, 1
      %p145 = scmp.ne.s32.totalorder %s140, %s142
      %p146 = scmp.eq.s32.totalorder %s24, 0
      %p147 = por %p145, %p146
      %p148 = scmp.ne.s32.totalorder %s140, %s142
      %p149 = scmp.eq.s32.totalorder %s29, 1
      %p150 = por %p148, %p149
      %p151 = scmp.ne.s32.totalorder %s142, %s143
      %p152 = scmp.eq.s32.totalorder %s29, 0
      %p153 = por %p151, %p152
      %p154 = scmp.ne.s32.totalorder %s142, %s143
      %p155 = scmp.eq.s32.totalorder %s30, 1
      %p156 = por %p154, %p155
      %p158 = scmp.ne.s32.totalorder %s143, %s157
      %p159 = scmp.eq.s32.totalorder %s30, 0
      %p160 = por %p158, %p159
      %s162 = sadd.s32 %s161, 1
      %p165 = scmp.eq.s32.totalorder %s24, 1
      %p166 = scmp.ne.s32.totalorder %s161, %s163
      %p167 = scmp.eq.s32.totalorder %s24, 0
      %p168 = por %p166, %p167
      %p169 = scmp.ne.s32.totalorder %s161, %s163
      %p170 = scmp.eq.s32.totalorder %s29, 1
      %p171 = por %p169, %p170
      %p172 = scmp.ne.s32.totalorder %s163, %s164
      %p173 = scmp.eq.s32.totalorder %s29, 0
      %p174 = por %p172, %p173
      %p175 = scmp.ne.s32.totalorder %s163, %s164
      %p176 = scmp.eq.s32.totalorder %s30, 1
      %p177 = por %p175, %p176
      %p179 = scmp.ne.s32.totalorder %s164, %s178
      %p180 = scmp.eq.s32.totalorder %s30, 0
      %p181 = por %p179, %p180
      %s183 = sadd.s32 %s182, 1
      %p186 = scmp.eq.s32.totalorder %s24, 1
      %p187 = scmp.ne.s32.totalorder %s182, %s184
      %p188 = scmp.eq.s32.totalorder %s24, 0
      %p189 = por %p187, %p188
      %p190 = scmp.ne.s32.totalorder %s182, %s184
      %p191 = scmp.eq.s32.totalorder %s29, 1
      %p192 = por %p190, %p191
      %p193 = scmp.ne.s32.totalorder %s184, %s185
      %p194 = scmp.eq.s32.totalorder %s29, 0
      %p195 = por %p193, %p194
      %p196 = scmp.ne.s32.totalorder %s184, %s185
      %p197 = scmp.eq.s32.totalorder %s30, 1
      %p198 = por %p196, %p197
      %p200 = scmp.ne.s32.totalorder %s185, %s199
      %p201 = scmp.eq.s32.totalorder %s30, 0
      %p202 = por %p200, %p201
      %s204 = sadd.s32 %s203, 1
      %p207 = scmp.eq.s32.totalorder %s24, 1
      %p208 = scmp.ne.s32.totalorder %s203, %s205
      %p209 = scmp.eq.s32.totalorder %s24, 0
      %p210 = por %p208, %p209
      %p211 = scmp.ne.s32.totalorder %s203, %s205
      %p212 = scmp.eq.s32.totalorder %s29, 1
      %p213 = por %p211, %p212
      %p214 = scmp.ne.s32.totalorder %s205, %s206
      %p215 = scmp.eq.s32.totalorder %s29, 0
      %p216 = por %p214, %p215
      %p217 = scmp.ne.s32.totalorder %s205, %s206
      %p218 = scmp.eq.s32.totalorder %s30, 1
      %p219 = por %p217, %p218
      %p221 = scmp.ne.s32.totalorder %s206, %s220
      %p222 = scmp.eq.s32.totalorder %s30, 0
      %p223 = por %p221, %p222
      %s225 = sadd.s32 %s224, 1
      %p228 = scmp.eq.s32.totalorder %s24, 1
      %p229 = scmp.ne.s32.totalorder %s224, %s226
      %p230 = scmp.eq.s32.totalorder %s24, 0
      %p231 = por %p229, %p230
      %p232 = scmp.ne.s32.totalorder %s224, %s226
      %p233 = scmp.eq.s32.totalorder %s29, 1
      %p234 = por %p232, %p233
      %p235 = scmp.ne.s32.totalorder %s226, %s227
      %p236 = scmp.eq.s32.totalorder %s29, 0
      %p237 = por %p235, %p236
      %p238 = scmp.ne.s32.totalorder %s226, %s227
      %p239 = scmp.eq.s32.totalorder %s30, 1
      %p240 = por %p238, %p239
      %p242 = scmp.ne.s32.totalorder %s227, %s241
      %p243 = scmp.eq.s32.totalorder %s30, 0
      %p244 = por %p242, %p243
      %s245 = ssub.s32 %s32, %s39
      %p246 = scmp.eq.s32.totalorder %s245, 0
      %s248 = sadd.s32 %s247, 1
      %s249 = scalar_select %p246, %s247, %s248
      %p252 = pneg %p246
      %p253 = scmp.eq.s32.totalorder %s24, 1
      %p254 = por %p252, %p253
      %p255 = scmp.ne.s32.totalorder %s247, %s250
      %p256 = scmp.eq.s32.totalorder %s24, 0
      %p257 = por %p255, %p256
      %p258 = scmp.ne.s32.totalorder %s247, %s250
      %p259 = scmp.eq.s32.totalorder %s29, 1
      %p260 = por %p258, %p259
      %p261 = scmp.ne.s32.totalorder %s250, %s251
      %p262 = scmp.eq.s32.totalorder %s29, 0
      %p263 = por %p261, %p262
      %p264 = scmp.ne.s32.totalorder %s250, %s251
      %p265 = scmp.eq.s32.totalorder %s30, 1
      %p266 = por %p264, %p265
      %p268 = scmp.ne.s32.totalorder %s251, %s267
      %p269 = scmp.eq.s32.totalorder %s30, 0
      %p270 = por %p268, %p269
      %s271 = ssub.s32 %s31, %s43
      %s272 = ssub.s32 %s32, %s39
      %s273 = sor.u32 %s271, %s272
      %p274 = scmp.eq.s32.totalorder %s273, 0
      %s276 = sadd.s32 %s275, 1
      %s277 = scalar_select %p274, %s275, %s276
      %p280 = pneg %p274
      %p281 = scmp.eq.s32.totalorder %s24, 1
      %p282 = por %p280, %p281
      %p283 = scmp.ne.s32.totalorder %s275, %s278
      %p284 = scmp.eq.s32.totalorder %s24, 0
      %p285 = por %p283, %p284
      %p286 = scmp.ne.s32.totalorder %s275, %s278
      %p287 = scmp.eq.s32.totalorder %s29, 1
      %p288 = por %p286, %p287
      %p289 = scmp.ne.s32.totalorder %s278, %s279
      %p290 = scmp.eq.s32.totalorder %s29, 0
      %p291 = por %p289, %p290
      %p292 = scmp.ne.s32.totalorder %s278, %s279
      %p293 = scmp.eq.s32.totalorder %s30, 1
      %p294 = por %p292, %p293
      %p296 = scmp.ne.s32.totalorder %s279, %s295
      %p297 = scmp.eq.s32.totalorder %s30, 0
      %p298 = por %p296, %p297
      %p299 = scmp.le.s32.totalorder 1, %s24
      %p300 = scmp.lt.s32.totalorder %s24, 3
      %p301 = pnand %p299, %p300
      %p302 = pneg %p301
      // Predicated region
      $region9: #{tpu_custom_call.1} parent=5 // pred_check
        _
      $region10: #{tpu_custom_call.1} parent=5 // pred_check_branch
        %304 = sbr.rel (%p301) target = $region12
      $region11: #{tpu_custom_call.1} parent=5 // pred_region
        %s305 = ssub.s32 %s24, 1
        // Predicated region
        $region13: #{tpu_custom_call.1} parent=11 // pred_check
          %p306 = pneg %p57
        $region14: #{tpu_custom_call.1} parent=11 // pred_check_branch
          %308 = sbr.rel (%p306) target = $region16
        $region15: #{tpu_custom_call.1} parent=11 // pred_region
          _
        $region16: #{tpu_custom_call.1} parent=11 // pred_fallthru
          _
        // Predicated region
        $region17: #{tpu_custom_call.1} parent=11 // pred_check
          %p309 = pneg %p132
        $region18: #{tpu_custom_call.1} parent=11 // pred_check_branch
          %311 = sbr.rel (%p309) target = $region20
        $region19: #{tpu_custom_call.1} parent=11 // pred_region
          _
        $region20: #{tpu_custom_call.1} parent=11 // pred_fallthru
          _
        // Predicated region
        $region21: #{tpu_custom_call.1} parent=11 // pred_check
          %p312 = pneg %p153
        $region22: #{tpu_custom_call.1} parent=11 // pred_check_branch
          %314 = sbr.rel (%p312) target = $region24
        $region23: #{tpu_custom_call.1} parent=11 // pred_region
          _
        $region24: #{tpu_custom_call.1} parent=11 // pred_fallthru
          _
        // Predicated region
        $region25: #{tpu_custom_call.1} parent=11 // pred_check
          %p315 = pneg %p174
        $region26: #{tpu_custom_call.1} parent=11 // pred_check_branch
          %317 = sbr.rel (%p315) target = $region28
        $region27: #{tpu_custom_call.1} parent=11 // pred_region
          _
        $region28: #{tpu_custom_call.1} parent=11 // pred_fallthru
          _
        // Predicated region
        $region29: #{tpu_custom_call.1} parent=11 // pred_check
          %p318 = pneg %p195
        $region30: #{tpu_custom_call.1} parent=11 // pred_check_branch
          %320 = sbr.rel (%p318) target = $region32
        $region31: #{tpu_custom_call.1} parent=11 // pred_region
          _
        $region32: #{tpu_custom_call.1} parent=11 // pred_fallthru
          _
        // Predicated region
        $region33: #{tpu_custom_call.1} parent=11 // pred_check
          %p321 = pneg %p216
        $region34: #{tpu_custom_call.1} parent=11 // pred_check_branch
          %323 = sbr.rel (%p321) target = $region36
        $region35: #{tpu_custom_call.1} parent=11 // pred_region
          _
        $region36: #{tpu_custom_call.1} parent=11 // pred_fallthru
          _
        // Predicated region
        $region37: #{tpu_custom_call.1} parent=11 // pred_check
          %p324 = pneg %p237
        $region38: #{tpu_custom_call.1} parent=11 // pred_check_branch
          %326 = sbr.rel (%p324) target = $region40
        $region39: #{tpu_custom_call.1} parent=11 // pred_region
          _
        $region40: #{tpu_custom_call.1} parent=11 // pred_fallthru
          _
        // Predicated region
        $region41: #{tpu_custom_call.1} parent=11 // pred_check
          %p327 = pneg %p263
        $region42: #{tpu_custom_call.1} parent=11 // pred_check_branch
          %329 = sbr.rel (%p327) target = $region44
        $region43: #{tpu_custom_call.1} parent=11 // pred_region
          %s330 = smul.u32 16, %s34
          %s332 = ssub.s32 2048, 2048
          %333 = vsyncadd [#allocation7], %s332
          %s334 = smul.addr %s330, 128
          %s335 = scalar_lea.hbm %s9, %s334
          %s336 = sshll.u32 [#allocation6], 4
          %s337 = int_to_ptr.vmem [resolvable:$true] %s336
          %342 = dma.hbm_to_vmem [thread:$0]  %s335, 2048, %s337, [#allocation7], 128, 128, 8
        $region44: #{tpu_custom_call.1} parent=11 // pred_fallthru
          _
      $region12: #{tpu_custom_call.1} parent=5 // pred_fallthru
        _
      %p343 = scmp.lt.s32.totalorder %s24, 2
      // Predicated region
      $region45: #{tpu_custom_call.1} parent=5 // pred_check
        %p344 = pneg %p343
      $region46: #{tpu_custom_call.1} parent=5 // pred_check_branch
        %346 = sbr.rel (%p344) target = $region48
      $region47: #{tpu_custom_call.1} parent=5 // pred_region
        // Predicated region
        $region49: #{tpu_custom_call.1} parent=47 // pred_check
          %p347 = pneg %p77
        $region50: #{tpu_custom_call.1} parent=47 // pred_check_branch
          %349 = sbr.rel (%p347) target = $region52
        $region51: #{tpu_custom_call.1} parent=47 // pred_region
          %p350 = scmp.lt.s32.totalorder %s31, 1
          %s351 = scalar_select %p350, %s31, 1
          %s352 = smul.addr %s351, 8
          %s353 = smul.addr %s352, 8
          %s354 = scalar_lea.vmem %s1, %s353
        $region52: #{tpu_custom_call.1} parent=47 // pred_fallthru
          _
        // Predicated region
        $region53: #{tpu_custom_call.1} parent=47 // pred_check
          %p355 = pneg %p105
        $region54: #{tpu_custom_call.1} parent=47 // pred_check_branch
          %357 = sbr.rel (%p355) target = $region56
        $region55: #{tpu_custom_call.1} parent=47 // pred_region
          %s358 = sand.u32 %s95, 1
          %s359 = scalar_lea.sflag [#allocation4], %s358
          %s360 = sand.u32 %s95, 1
          %s361 = smul.addr %s360, 64
          %s362 = scalar_lea.vmem [#allocation3], %s361
          %s364 = ssub.s32 1024, 1024
          %365 = vsyncadd %s359, %s364
          %s366 = smul.addr %s31, 8
          %s367 = sadd.s32 %s32, %s366
          %s368 = smul.addr %s367, 128
          %s369 = scalar_lea.hbm %s2, %s368
          %s370 = sshll.u32 %s362, 4
          %s371 = int_to_ptr.vmem [resolvable:$true] %s370
          %376 = dma.hbm_to_vmem [thread:$0]  %s369, 1024, %s371, %s359, 128, 128, 8
        $region56: #{tpu_custom_call.1} parent=47 // pred_fallthru
          _
      $region48: #{tpu_custom_call.1} parent=5 // pred_fallthru
        _
      %p377 = scmp.le.s32.totalorder 1, %s24
      %p378 = scmp.lt.s32.totalorder %s24, 3
      %p379 = pnand %p377, %p378
      %p380 = pneg %p379
      // Predicated region
      $region57: #{tpu_custom_call.1} parent=5 // pred_check
        _
      $region58: #{tpu_custom_call.1} parent=5 // pred_check_branch
        %382 = sbr.rel (%p379) target = $region60
      $region59: #{tpu_custom_call.1} parent=5 // pred_region
        %s383 = ssub.s32 %s24, 1
        %s384 = sand.u32 %s98, 1
        %s385 = scalar_lea.sflag [#allocation4], %s384
        %s386 = sand.u32 %s98, 1
        %s387 = smul.addr %s386, 64
        %s388 = scalar_lea.vmem [#allocation3], %s387
        // Predicated region
        $region61: #{tpu_custom_call.1} parent=59 // pred_check
          %p389 = pneg %p111
        $region62: #{tpu_custom_call.1} parent=59 // pred_check_branch
          %391 = sbr.rel (%p389) target = $region64
        $region63: #{tpu_custom_call.1} parent=59 // pred_region
          %392 = dma.done %s385, 1024
        $region64: #{tpu_custom_call.1} parent=59 // pred_fallthru
          _
        // Predicated region
        $region65: #{tpu_custom_call.1} parent=59 // pred_check
          %p393 = pneg %p263
        $region66: #{tpu_custom_call.1} parent=59 // pred_check_branch
          %395 = sbr.rel (%p393) target = $region68
        $region67: #{tpu_custom_call.1} parent=59 // pred_region
          %396 = dma.done [#allocation7], 2048
        $region68: #{tpu_custom_call.1} parent=59 // pred_fallthru
          _
        %p397 = pneg %p57
        %p398 = pneg %p54
        %p399 = scmp.lt.s32.totalorder %s33, 1
        %s400 = scalar_select %p399, %s33, 1
        %s401 = smul.addr %s400, 8
        %s402 = smul.addr %s401, 8
        %s403 = scalar_lea.vmem %s1, %s402
        %p404 = pneg %p83
        %p405 = pneg %p80
        %s406 = sand.u32 %s98, 1
        %s407 = scalar_lea.sflag [#allocation4], %s406
        %s408 = sand.u32 %s98, 1
        %s409 = smul.addr %s408, 64
        %s410 = scalar_lea.vmem [#allocation3], %s409
        %p411 = pneg %p111
        %p412 = pneg %p108
        %p413 = pneg %p132
        %p414 = pneg %p129
        %p415 = pneg %p153
        %p416 = pneg %p150
        %p417 = pneg %p174
        %p418 = pneg %p171
        %p419 = pneg %p195
        %p420 = pneg %p192
        %p421 = pneg %p216
        %p422 = pneg %p213
        %p423 = pneg %p237
        %p424 = pneg %p234
        %p425 = pneg %p263
        %p426 = pneg %p260
        %p427 = pneg %p291
        %p428 = pneg %p288
        %s429 = sand.u32 %s278, 1
        %s430 = scalar_lea.sflag [#allocation5], %s429
        %s431 = sand.u32 %s278, 1
        %s432 = smul.addr %s431, 64
        %s433 = scalar_lea.vmem [#allocation8], %s432
        %p434 = scmp.lt.s32.totalorder %s33, 1
        %s435 = scalar_select %p434, %s33, 1
        %s436 = smul.addr %s435, 8
        %s437 = smul.addr %s436, 8
        %s438 = scalar_lea.vmem %s1, %s437
        %s439 = smul.u32 16, %s34
        %v440 = vld [vmem:[%s438] sm:$0xff]
        %v441 = vld [vmem:[%s438 + $0x8] sm:$0xff]
        %v442 = vld [vmem:[%s438 + $0x10] sm:$0xff]
        %v443 = vld [vmem:[%s438 + $0x18] sm:$0xff]
        %v444 = vld [vmem:[%s438 + $0x20] sm:$0xff]
        %v445 = vld [vmem:[%s438 + $0x28] sm:$0xff]
        %v446 = vld [vmem:[%s438 + $0x30] sm:$0xff]
        %v447 = vld [vmem:[%s438 + $0x38] sm:$0xff]
        %v448 = vld [vmem:[%s388] sm:$0xff]
        %v449 = vld [vmem:[%s388 + $0x8] sm:$0xff]
        %v450 = vld [vmem:[%s388 + $0x10] sm:$0xff]
        %v451 = vld [vmem:[%s388 + $0x18] sm:$0xff]
        %v452 = vld [vmem:[%s388 + $0x20] sm:$0xff]
        %v453 = vld [vmem:[%s388 + $0x28] sm:$0xff]
        %v454 = vld [vmem:[%s388 + $0x30] sm:$0xff]
        %v455 = vld [vmem:[%s388 + $0x38] sm:$0xff]
        %v456 = vld [vmem:[%s3] sm:$0xff]
        %v457 = vld [vmem:[%s3 + $0x8] sm:$0xff]
        %v458 = vld [vmem:[%s3 + $0x10] sm:$0xff]
        %v459 = vld [vmem:[%s3 + $0x18] sm:$0xff]
        %v460 = vld [vmem:[%s3 + $0x20] sm:$0xff]
        %v461 = vld [vmem:[%s3 + $0x28] sm:$0xff]
        %v462 = vld [vmem:[%s3 + $0x30] sm:$0xff]
        %v463 = vld [vmem:[%s3 + $0x38] sm:$0xff]
        %v464 = vld [vmem:[%s4] sm:$0xff]
        %466 = vset.pattern.permute.xlu0 0
        %467 = vperm.xlu0 %466, %v464
        %v468 = vpop.permute.xlu0 %467
        %470 = vxpose.xlu0.b32.start [1/16] %v456, 128
        %471 = vxpose.xlu0.b32.cont [2/16] %v457, 128
        %472 = vxpose.xlu0.b32.cont [3/16] %v458, 128
        %473 = vxpose.xlu0.b32.cont [4/16] %v459, 128
        %474 = vxpose.xlu0.b32.cont [5/16] %v460, 128
        %475 = vxpose.xlu0.b32.cont [6/16] %v461, 128
        %476 = vxpose.xlu0.b32.cont [7/16] %v462, 128
        %477 = vxpose.xlu0.b32.cont [8/16] %v463, 128
        %478 = vxpose.xlu0.b32.cont [9/16] 0.0, 128
        %479 = vxpose.xlu0.b32.cont [10/16] 0.0, 128
        %480 = vxpose.xlu0.b32.cont [11/16] 0.0, 128
        %481 = vxpose.xlu0.b32.cont [12/16] 0.0, 128
        %482 = vxpose.xlu0.b32.cont [13/16] 0.0, 128
        %483 = vxpose.xlu0.b32.cont [14/16] 0.0, 128
        %484 = vxpose.xlu0.b32.cont [15/16] 0.0, 128
        %485 = vxpose.xlu0.b32.end [16/16] 0.0, 128
        %v486 = vpop.trf.xlu0
        %v487 = vpop.trf.xlu0
        %v488 = vpop.trf.xlu0
        %v489 = vpop.trf.xlu0
        %v490 = vpop.trf.xlu0
        %v491 = vpop.trf.xlu0
        %v492 = vpop.trf.xlu0
        %v493 = vpop.trf.xlu0
        %v494 = vpop.trf.xlu0
        %v495 = vpop.trf.xlu0
        %v496 = vpop.trf.xlu0
        %v497 = vpop.trf.xlu0
        %v498 = vpop.trf.xlu0
        %v499 = vpop.trf.xlu0
        %v500 = vpop.trf.xlu0
        %v501 = vpop.trf.xlu0
        %vm502 = vcmask 523264
        %v504 = vsel %vm502, %v486, 0
        %506 = vmatprep.subr.mxu0 0.0
        %507 = vmatpush1.msra.mxu0 0.0
        %508 = vmatprep.subr.mxu0 0.0
        %509 = vmatpush1.msra.mxu0 0.0
        %510 = vmatprep.subr.mxu0 0.0
        %511 = vmatpush1.msra.mxu0 0.0
        %512 = vmatprep.subr.mxu0 0.0
        %513 = vmatpush1.msra.mxu0 0.0
        %514 = vmatprep.subr.mxu0 0.0
        %515 = vmatpush1.msra.mxu0 0.0
        %516 = vmatprep.subr.mxu0 0.0
        %517 = vmatpush1.msra.mxu0 0.0
        %518 = vmatprep.subr.mxu0 0.0
        %519 = vmatpush1.msra.mxu0 0.0
        %520 = vmatprep.subr.mxu0 0.0
        %521 = vmatpush1.msra.mxu0 0.0
        %522 = vmatprep.subr.mxu0 0.0
        %523 = vmatpush1.msra.mxu0 %v455
        %524 = vmatprep.subr.mxu0 0.0
        %525 = vmatpush1.msra.mxu0 %v454
        %526 = vmatprep.subr.mxu0 0.0
        %527 = vmatpush1.msra.mxu0 %v453
        %528 = vmatprep.subr.mxu0 0.0
        %529 = vmatpush1.msra.mxu0 %v452
        %530 = vmatprep.subr.mxu0 0.0
        %531 = vmatpush1.msra.mxu0 %v451
        %532 = vmatprep.subr.mxu0 0.0
        %533 = vmatpush1.msra.mxu0 %v450
        %534 = vmatprep.subr.mxu0 0.0
        %535 = vmatpush1.msra.mxu0 %v449
        %536 = vmatprep.subr.mxu0 0.0
        %537 = vmatpush1.msra.mxu0 %v448
        %538 = vmatprep.subr.mxu0 0.0
        %539 = vmatpush2.msra.mxu0 0.0
        %540 = vmatprep.subr.mxu0 0.0
        %541 = vmatpush2.msra.mxu0 0.0
        %542 = vmatprep.subr.mxu0 0.0
        %543 = vmatpush2.msra.mxu0 0.0
        %544 = vmatprep.subr.mxu0 0.0
        %545 = vmatpush2.msra.mxu0 0.0
        %546 = vmatprep.subr.mxu0 0.0
        %547 = vmatpush2.msra.mxu0 0.0
        %548 = vmatprep.subr.mxu0 0.0
        %549 = vmatpush2.msra.mxu0 0.0
        %550 = vmatprep.subr.mxu0 0.0
        %551 = vmatpush2.msra.mxu0 0.0
        %552 = vmatprep.subr.mxu0 0.0
        %553 = vmatpush2.msra.mxu0 0.0
        %554 = vmatprep.subr.mxu0 0.0
        %555 = vmatpush2.msra.mxu0 0.0
        %556 = vmatprep.subr.mxu0 0.0
        %557 = vmatpush2.msra.mxu0 0.0
        %558 = vmatprep.subr.mxu0 0.0
        %559 = vmatpush2.msra.mxu0 0.0
        %560 = vmatprep.subr.mxu0 0.0
        %561 = vmatpush2.msra.mxu0 0.0
        %562 = vmatprep.subr.mxu0 0.0
        %563 = vmatpush2.msra.mxu0 0.0
        %564 = vmatprep.subr.mxu0 0.0
        %565 = vmatpush2.msra.mxu0 0.0
        %566 = vmatprep.subr.mxu0 0.0
        %567 = vmatpush2.msra.mxu0 0.0
        %568 = vmatprep.subr.mxu0 0.0
        %569 = vmatpush2.msra.mxu0 0.0
        %570 = vmatprep.mubr.f32.mxu0 0.0
        %571 = vmatmul.mubr.f32.gmra.mxu0 %v504
        %v572 = vpop.f32.mrf.mxu0
        %v573 = vadd.f32 %v468, %v572
        %v574 = vpop.f32.mrf.mxu0
        %575 = vdwg.mxu0
        %v576 = vld [vmem:[%s5] sm:$0xff]
        %v577 = vld [vmem:[%s5 + $0x8] sm:$0xff]
        %v578 = vld [vmem:[%s5 + $0x10] sm:$0xff]
        %v579 = vld [vmem:[%s5 + $0x18] sm:$0xff]
        %v580 = vld [vmem:[%s5 + $0x20] sm:$0xff]
        %v581 = vld [vmem:[%s5 + $0x28] sm:$0xff]
        %v582 = vld [vmem:[%s5 + $0x30] sm:$0xff]
        %v583 = vld [vmem:[%s5 + $0x38] sm:$0xff]
        %v584 = vld [vmem:[%s6] sm:$0xff]
        %586 = vset.pattern.permute.xlu0 0
        %587 = vperm.xlu0 %586, %v584
        %v588 = vpop.permute.xlu0 %587
        %590 = vxpose.xlu0.b32.start [1/16] %v576, 128
        %591 = vxpose.xlu0.b32.cont [2/16] %v577, 128
        %592 = vxpose.xlu0.b32.cont [3/16] %v578, 128
        %593 = vxpose.xlu0.b32.cont [4/16] %v579, 128
        %594 = vxpose.xlu0.b32.cont [5/16] %v580, 128
        %595 = vxpose.xlu0.b32.cont [6/16] %v581, 128
        %596 = vxpose.xlu0.b32.cont [7/16] %v582, 128
        %597 = vxpose.xlu0.b32.cont [8/16] %v583, 128
        %598 = vxpose.xlu0.b32.cont [9/16] 0.0, 128
        %599 = vxpose.xlu0.b32.cont [10/16] 0.0, 128
        %600 = vxpose.xlu0.b32.cont [11/16] 0.0, 128
        %601 = vxpose.xlu0.b32.cont [12/16] 0.0, 128
        %602 = vxpose.xlu0.b32.cont [13/16] 0.0, 128
        %603 = vxpose.xlu0.b32.cont [14/16] 0.0, 128
        %604 = vxpose.xlu0.b32.cont [15/16] 0.0, 128
        %605 = vxpose.xlu0.b32.end [16/16] 0.0, 128
        %v606 = vpop.trf.xlu0
        %v607 = vpop.trf.xlu0
        %v608 = vpop.trf.xlu0
        %v609 = vpop.trf.xlu0
        %v610 = vpop.trf.xlu0
        %v611 = vpop.trf.xlu0
        %v612 = vpop.trf.xlu0
        %v613 = vpop.trf.xlu0
        %v614 = vpop.trf.xlu0
        %v615 = vpop.trf.xlu0
        %v616 = vpop.trf.xlu0
        %v617 = vpop.trf.xlu0
        %v618 = vpop.trf.xlu0
        %v619 = vpop.trf.xlu0
        %v620 = vpop.trf.xlu0
        %v621 = vpop.trf.xlu0
        %v623 = vsel %vm502, %v606, 0
        %625 = vmatprep.subr.mxu0 0.0
        %626 = vmatpush1.msra.mxu0 0.0
        %627 = vmatprep.subr.mxu0 0.0
        %628 = vmatpush1.msra.mxu0 0.0
        %629 = vmatprep.subr.mxu0 0.0
        %630 = vmatpush1.msra.mxu0 0.0
        %631 = vmatprep.subr.mxu0 0.0
        %632 = vmatpush1.msra.mxu0 0.0
        %633 = vmatprep.subr.mxu0 0.0
        %634 = vmatpush1.msra.mxu0 0.0
        %635 = vmatprep.subr.mxu0 0.0
        %636 = vmatpush1.msra.mxu0 0.0
        %637 = vmatprep.subr.mxu0 0.0
        %638 = vmatpush1.msra.mxu0 0.0
        %639 = vmatprep.subr.mxu0 0.0
        %640 = vmatpush1.msra.mxu0 0.0
        %641 = vmatprep.subr.mxu0 0.0
        %642 = vmatpush1.msra.mxu0 %v447
        %643 = vmatprep.subr.mxu0 0.0
        %644 = vmatpush1.msra.mxu0 %v446
        %645 = vmatprep.subr.mxu0 0.0
        %646 = vmatpush1.msra.mxu0 %v445
        %647 = vmatprep.subr.mxu0 0.0
        %648 = vmatpush1.msra.mxu0 %v444
        %649 = vmatprep.subr.mxu0 0.0
        %650 = vmatpush1.msra.mxu0 %v443
        %651 = vmatprep.subr.mxu0 0.0
        %652 = vmatpush1.msra.mxu0 %v442
        %653 = vmatprep.subr.mxu0 0.0
        %654 = vmatpush1.msra.mxu0 %v441
        %655 = vmatprep.subr.mxu0 0.0
        %656 = vmatpush1.msra.mxu0 %v440
        %657 = vmatprep.subr.mxu0 0.0
        %658 = vmatpush2.msra.mxu0 0.0
        %659 = vmatprep.subr.mxu0 0.0
        %660 = vmatpush2.msra.mxu0 0.0
        %661 = vmatprep.subr.mxu0 0.0
        %662 = vmatpush2.msra.mxu0 0.0
        %663 = vmatprep.subr.mxu0 0.0
        %664 = vmatpush2.msra.mxu0 0.0
        %665 = vmatprep.subr.mxu0 0.0
        %666 = vmatpush2.msra.mxu0 0.0
        %667 = vmatprep.subr.mxu0 0.0
        %668 = vmatpush2.msra.mxu0 0.0
        %669 = vmatprep.subr.mxu0 0.0
        %670 = vmatpush2.msra.mxu0 0.0
        %671 = vmatprep.subr.mxu0 0.0
        %672 = vmatpush2.msra.mxu0 0.0
        %673 = vmatprep.subr.mxu0 0.0
        %674 = vmatpush2.msra.mxu0 0.0
        %675 = vmatprep.subr.mxu0 0.0
        %676 = vmatpush2.msra.mxu0 0.0
        %677 = vmatprep.subr.mxu0 0.0
        %678 = vmatpush2.msra.mxu0 0.0
        %679 = vmatprep.subr.mxu0 0.0
        %680 = vmatpush2.msra.mxu0 0.0
        %681 = vmatprep.subr.mxu0 0.0
        %682 = vmatpush2.msra.mxu0 0.0
        %683 = vmatprep.subr.mxu0 0.0
        %684 = vmatpush2.msra.mxu0 0.0
        %685 = vmatprep.subr.mxu0 0.0
        %686 = vmatpush2.msra.mxu0 0.0
        %687 = vmatprep.subr.mxu0 0.0
        %688 = vmatpush2.msra.mxu0 0.0
        %689 = vmatprep.mubr.f32.mxu0 0.0
        %690 = vmatmul.mubr.f32.gmra.mxu0 %v623
        %v691 = vpop.f32.mrf.mxu0
        %v692 = vadd.f32 %v588, %v691
        %v693 = vpop.f32.mrf.mxu0
        %694 = vdwg.mxu0
        %v695 = vld [vmem:[%s7] sm:$0xff]
        %v696 = vld [vmem:[%s7 + $0x8] sm:$0xff]
        %v697 = vld [vmem:[%s7 + $0x10] sm:$0xff]
        %v698 = vld [vmem:[%s7 + $0x18] sm:$0xff]
        %v699 = vld [vmem:[%s7 + $0x20] sm:$0xff]
        %v700 = vld [vmem:[%s7 + $0x28] sm:$0xff]
        %v701 = vld [vmem:[%s7 + $0x30] sm:$0xff]
        %v702 = vld [vmem:[%s7 + $0x38] sm:$0xff]
        %v703 = vld [vmem:[%s8] sm:$0xff]
        %v704 = vld [vmem:[%s8 + $0x8] sm:$0xff]
        %v705 = vld [vmem:[%s8 + $0x10] sm:$0xff]
        %v706 = vld [vmem:[%s8 + $0x18] sm:$0xff]
        %v707 = vld [vmem:[%s8 + $0x20] sm:$0xff]
        %v708 = vld [vmem:[%s8 + $0x28] sm:$0xff]
        %v709 = vld [vmem:[%s8 + $0x30] sm:$0xff]
        %v710 = vld [vmem:[%s8 + $0x38] sm:$0xff]
        %712 = vset.pattern.permute.xlu0 0
        %713 = vperm.xlu0 %712, %v703
        %v714 = vpop.permute.xlu0 %713
        %717 = vset.pattern.permute.xlu0 0
        %718 = vperm.xlu0 %717, %v704
        %v719 = vpop.permute.xlu0 %718
        %722 = vset.pattern.permute.xlu0 0
        %723 = vperm.xlu0 %722, %v705
        %v724 = vpop.permute.xlu0 %723
        %727 = vset.pattern.permute.xlu0 0
        %728 = vperm.xlu0 %727, %v706
        %v729 = vpop.permute.xlu0 %728
        %732 = vset.pattern.permute.xlu0 0
        %733 = vperm.xlu0 %732, %v707
        %v734 = vpop.permute.xlu0 %733
        %737 = vset.pattern.permute.xlu0 0
        %738 = vperm.xlu0 %737, %v708
        %v739 = vpop.permute.xlu0 %738
        %742 = vset.pattern.permute.xlu0 0
        %743 = vperm.xlu0 %742, %v709
        %v744 = vpop.permute.xlu0 %743
        %747 = vset.pattern.permute.xlu0 0
        %748 = vperm.xlu0 %747, %v710
        %v749 = vpop.permute.xlu0 %748
        %751 = vxpose.xlu0.b32.start [1/16] %v695, 128
        %752 = vxpose.xlu0.b32.cont [2/16] %v696, 128
        %753 = vxpose.xlu0.b32.cont [3/16] %v697, 128
        %754 = vxpose.xlu0.b32.cont [4/16] %v698, 128
        %755 = vxpose.xlu0.b32.cont [5/16] %v699, 128
        %756 = vxpose.xlu0.b32.cont [6/16] %v700, 128
        %757 = vxpose.xlu0.b32.cont [7/16] %v701, 128
        %758 = vxpose.xlu0.b32.cont [8/16] %v702, 128
        %759 = vxpose.xlu0.b32.cont [9/16] 0.0, 128
        %760 = vxpose.xlu0.b32.cont [10/16] 0.0, 128
        %761 = vxpose.xlu0.b32.cont [11/16] 0.0, 128
        %762 = vxpose.xlu0.b32.cont [12/16] 0.0, 128
        %763 = vxpose.xlu0.b32.cont [13/16] 0.0, 128
        %764 = vxpose.xlu0.b32.cont [14/16] 0.0, 128
        %765 = vxpose.xlu0.b32.cont [15/16] 0.0, 128
        %766 = vxpose.xlu0.b32.end [16/16] 0.0, 128
        %v767 = vpop.trf.xlu0
        %v768 = vpop.trf.xlu0
        %v769 = vpop.trf.xlu0
        %v770 = vpop.trf.xlu0
        %v771 = vpop.trf.xlu0
        %v772 = vpop.trf.xlu0
        %v773 = vpop.trf.xlu0
        %v774 = vpop.trf.xlu0
        %v775 = vpop.trf.xlu0
        %v776 = vpop.trf.xlu0
        %v777 = vpop.trf.xlu0
        %v778 = vpop.trf.xlu0
        %v779 = vpop.trf.xlu0
        %v780 = vpop.trf.xlu0
        %v781 = vpop.trf.xlu0
        %v782 = vpop.trf.xlu0
        %v784 = vsel %vm502, %v767, 0
        %v787 = vsel %vm502, %v768, 0
        %v790 = vsel %vm502, %v769, 0
        %v793 = vsel %vm502, %v770, 0
        %v796 = vsel %vm502, %v771, 0
        %v799 = vsel %vm502, %v772, 0
        %v802 = vsel %vm502, %v773, 0
        %v805 = vsel %vm502, %v774, 0
        %807 = vmatprep.subr.mxu0 0.0
        %808 = vmatpush1.msra.mxu0 0.0
        %809 = vmatprep.subr.mxu0 0.0
        %810 = vmatpush1.msra.mxu0 0.0
        %811 = vmatprep.subr.mxu0 0.0
        %812 = vmatpush1.msra.mxu0 0.0
        %813 = vmatprep.subr.mxu0 0.0
        %814 = vmatpush1.msra.mxu0 0.0
        %815 = vmatprep.subr.mxu0 0.0
        %816 = vmatpush1.msra.mxu0 0.0
        %817 = vmatprep.subr.mxu0 0.0
        %818 = vmatpush1.msra.mxu0 0.0
        %819 = vmatprep.subr.mxu0 0.0
        %820 = vmatpush1.msra.mxu0 0.0
        %821 = vmatprep.subr.mxu0 0.0
        %822 = vmatpush1.msra.mxu0 0.0
        %823 = vmatprep.subr.mxu0 0.0
        %824 = vmatpush1.msra.mxu0 %v447
        %825 = vmatprep.subr.mxu0 0.0
        %826 = vmatpush1.msra.mxu0 %v446
        %827 = vmatprep.subr.mxu0 0.0
        %828 = vmatpush1.msra.mxu0 %v445
        %829 = vmatprep.subr.mxu0 0.0
        %830 = vmatpush1.msra.mxu0 %v444
        %831 = vmatprep.subr.mxu0 0.0
        %832 = vmatpush1.msra.mxu0 %v443
        %833 = vmatprep.subr.mxu0 0.0
        %834 = vmatpush1.msra.mxu0 %v442
        %835 = vmatprep.subr.mxu0 0.0
        %836 = vmatpush1.msra.mxu0 %v441
        %837 = vmatprep.subr.mxu0 0.0
        %838 = vmatpush1.msra.mxu0 %v440
        %839 = vmatprep.subr.mxu0 0.0
        %840 = vmatpush2.msra.mxu0 0.0
        %841 = vmatprep.subr.mxu0 0.0
        %842 = vmatpush2.msra.mxu0 0.0
        %843 = vmatprep.subr.mxu0 0.0
        %844 = vmatpush2.msra.mxu0 0.0
        %845 = vmatprep.subr.mxu0 0.0
        %846 = vmatpush2.msra.mxu0 0.0
        %847 = vmatprep.subr.mxu0 0.0
        %848 = vmatpush2.msra.mxu0 0.0
        %849 = vmatprep.subr.mxu0 0.0
        %850 = vmatpush2.msra.mxu0 0.0
        %851 = vmatprep.subr.mxu0 0.0
        %852 = vmatpush2.msra.mxu0 0.0
        %853 = vmatprep.subr.mxu0 0.0
        %854 = vmatpush2.msra.mxu0 0.0
        %855 = vmatprep.subr.mxu0 0.0
        %856 = vmatpush2.msra.mxu0 0.0
        %857 = vmatprep.subr.mxu0 0.0
        %858 = vmatpush2.msra.mxu0 0.0
        %859 = vmatprep.subr.mxu0 0.0
        %860 = vmatpush2.msra.mxu0 0.0
        %861 = vmatprep.subr.mxu0 0.0
        %862 = vmatpush2.msra.mxu0 0.0
        %863 = vmatprep.subr.mxu0 0.0
        %864 = vmatpush2.msra.mxu0 0.0
        %865 = vmatprep.subr.mxu0 0.0
        %866 = vmatpush2.msra.mxu0 0.0
        %867 = vmatprep.subr.mxu0 0.0
        %868 = vmatpush2.msra.mxu0 0.0
        %869 = vmatprep.subr.mxu0 0.0
        %870 = vmatpush2.msra.mxu0 0.0
        %871 = vmatprep.mubr.f32.mxu0 0.0
        %872 = vmatmul.mubr.f32.gmra.mxu0 %v784
        %v873 = vpop.f32.mrf.mxu0
        %v874 = vadd.f32 %v714, %v873
        %v875 = vpop.f32.mrf.mxu0
        %876 = vmatprep.mubr.f32.mxu0 0.0
        %877 = vmatmul.mubr.f32.gmra.mxu0 %v787
        %v878 = vpop.f32.mrf.mxu0
        %v879 = vadd.f32 %v719, %v878
        %v880 = vpop.f32.mrf.mxu0
        %881 = vmatprep.mubr.f32.mxu0 0.0
        %882 = vmatmul.mubr.f32.gmra.mxu0 %v790
        %v883 = vpop.f32.mrf.mxu0
        %v884 = vadd.f32 %v724, %v883
        %v885 = vpop.f32.mrf.mxu0
        %886 = vmatprep.mubr.f32.mxu0 0.0
        %887 = vmatmul.mubr.f32.gmra.mxu0 %v793
        %v888 = vpop.f32.mrf.mxu0
        %v889 = vadd.f32 %v729, %v888
        %v890 = vpop.f32.mrf.mxu0
        %891 = vmatprep.mubr.f32.mxu0 0.0
        %892 = vmatmul.mubr.f32.gmra.mxu0 %v796
        %v893 = vpop.f32.mrf.mxu0
        %v894 = vadd.f32 %v734, %v893
        %v895 = vpop.f32.mrf.mxu0
        %896 = vmatprep.mubr.f32.mxu0 0.0
        %897 = vmatmul.mubr.f32.gmra.mxu0 %v799
        %v898 = vpop.f32.mrf.mxu0
        %v899 = vadd.f32 %v739, %v898
        %v900 = vpop.f32.mrf.mxu0
        %901 = vmatprep.mubr.f32.mxu0 0.0
        %902 = vmatmul.mubr.f32.gmra.mxu0 %v802
        %v903 = vpop.f32.mrf.mxu0
        %v904 = vadd.f32 %v744, %v903
        %v905 = vpop.f32.mrf.mxu0
        %906 = vmatprep.mubr.f32.mxu0 0.0
        %907 = vmatmul.mubr.f32.gmra.mxu0 %v805
        %v908 = vpop.f32.mrf.mxu0
        %v909 = vadd.f32 %v749, %v908
        %v910 = vpop.f32.mrf.mxu0
        %911 = vdwg.mxu0
        %v912 = vld [vmem:[#allocation6] sm:$0xff]
        %v913 = vld [vmem:[#allocation6 + $0x8] sm:$0xff]
        %v914 = vld [vmem:[#allocation6 + $0x10] sm:$0xff]
        %v915 = vld [vmem:[#allocation6 + $0x18] sm:$0xff]
        %v916 = vld [vmem:[#allocation6 + $0x20] sm:$0xff]
        %v917 = vld [vmem:[#allocation6 + $0x28] sm:$0xff]
        %v918 = vld [vmem:[#allocation6 + $0x30] sm:$0xff]
        %v919 = vld [vmem:[#allocation6 + $0x38] sm:$0xff]
        %v920 = vld [vmem:[#allocation6 + $0x40] sm:$0xff]
        %v921 = vld [vmem:[#allocation6 + $0x48] sm:$0xff]
        %v922 = vld [vmem:[#allocation6 + $0x50] sm:$0xff]
        %v923 = vld [vmem:[#allocation6 + $0x58] sm:$0xff]
        %v924 = vld [vmem:[#allocation6 + $0x60] sm:$0xff]
        %v925 = vld [vmem:[#allocation6 + $0x68] sm:$0xff]
        %v926 = vld [vmem:[#allocation6 + $0x70] sm:$0xff]
        %v927 = vld [vmem:[#allocation6 + $0x78] sm:$0xff]
        %928 = vxpose.xlu0.b32.start [1/16] %v573, 128
        %929 = vxpose.xlu0.b32.cont [2/16] 0.0, 128
        %930 = vxpose.xlu0.b32.cont [3/16] 0.0, 128
        %931 = vxpose.xlu0.b32.cont [4/16] 0.0, 128
        %932 = vxpose.xlu0.b32.cont [5/16] 0.0, 128
        %933 = vxpose.xlu0.b32.cont [6/16] 0.0, 128
        %934 = vxpose.xlu0.b32.cont [7/16] 0.0, 128
        %935 = vxpose.xlu0.b32.cont [8/16] 0.0, 128
        %936 = vxpose.xlu0.b32.cont [9/16] 0.0, 128
        %937 = vxpose.xlu0.b32.cont [10/16] 0.0, 128
        %938 = vxpose.xlu0.b32.cont [11/16] 0.0, 128
        %939 = vxpose.xlu0.b32.cont [12/16] 0.0, 128
        %940 = vxpose.xlu0.b32.cont [13/16] 0.0, 128
        %941 = vxpose.xlu0.b32.cont [14/16] 0.0, 128
        %942 = vxpose.xlu0.b32.cont [15/16] 0.0, 128
        %943 = vxpose.xlu0.b32.end [16/16] 0.0, 128
        %v944 = vpop.trf.xlu0
        %v945 = vpop.trf.xlu0
        %v946 = vpop.trf.xlu0
        %v947 = vpop.trf.xlu0
        %v948 = vpop.trf.xlu0
        %v949 = vpop.trf.xlu0
        %v950 = vpop.trf.xlu0
        %v951 = vpop.trf.xlu0
        %v952 = vpop.trf.xlu0
        %v953 = vpop.trf.xlu0
        %v954 = vpop.trf.xlu0
        %v955 = vpop.trf.xlu0
        %v956 = vpop.trf.xlu0
        %v957 = vpop.trf.xlu0
        %v958 = vpop.trf.xlu0
        %v959 = vpop.trf.xlu0
        %vm960 = vcmask 64512
        %v962 = vsel %vm960, %v944, 0
        %v965 = vsel %vm960, %v945, 0
        %v968 = vsel %vm960, %v946, 0
        %v971 = vsel %vm960, %v947, 0
        %v974 = vsel %vm960, %v948, 0
        %v977 = vsel %vm960, %v949, 0
        %v980 = vsel %vm960, %v950, 0
        %v983 = vsel %vm960, %v951, 0
        %v986 = vsel %vm960, %v952, 0
        %v989 = vsel %vm960, %v953, 0
        %v992 = vsel %vm960, %v954, 0
        %v995 = vsel %vm960, %v955, 0
        %v998 = vsel %vm960, %v956, 0
        %v1001 = vsel %vm960, %v957, 0
        %v1004 = vsel %vm960, %v958, 0
        %v1007 = vsel %vm960, %v959, 0
        %1009 = vmatprep.subr.mxu0 0.0
        %1010 = vmatpush1.msra.mxu0 0.0
        %1011 = vmatprep.subr.mxu0 0.0
        %1012 = vmatpush1.msra.mxu0 0.0
        %1013 = vmatprep.subr.mxu0 0.0
        %1014 = vmatpush1.msra.mxu0 0.0
        %1015 = vmatprep.subr.mxu0 0.0
        %1016 = vmatpush1.msra.mxu0 0.0
        %1017 = vmatprep.subr.mxu0 0.0
        %1018 = vmatpush1.msra.mxu0 0.0
        %1019 = vmatprep.subr.mxu0 0.0
        %1020 = vmatpush1.msra.mxu0 0.0
        %1021 = vmatprep.subr.mxu0 0.0
        %1022 = vmatpush1.msra.mxu0 0.0
        %1023 = vmatprep.subr.mxu0 0.0
        %1024 = vmatpush1.msra.mxu0 0.0
        %1025 = vmatprep.subr.mxu0 0.0
        %1026 = vmatpush1.msra.mxu0 0.0
        %1027 = vmatprep.subr.mxu0 0.0
        %1028 = vmatpush1.msra.mxu0 0.0
        %1029 = vmatprep.subr.mxu0 0.0
        %1030 = vmatpush1.msra.mxu0 0.0
        %1031 = vmatprep.subr.mxu0 0.0
        %1032 = vmatpush1.msra.mxu0 0.0
        %1033 = vmatprep.subr.mxu0 0.0
        %1034 = vmatpush1.msra.mxu0 0.0
        %1035 = vmatprep.subr.mxu0 0.0
        %1036 = vmatpush1.msra.mxu0 0.0
        %1037 = vmatprep.subr.mxu0 0.0
        %1038 = vmatpush1.msra.mxu0 0.0
        %1039 = vmatprep.subr.mxu0 0.0
        %1040 = vmatpush1.msra.mxu0 %v692
        %1041 = vmatprep.subr.mxu0 0.0
        %1042 = vmatpush2.msra.mxu0 0.0
        %1043 = vmatprep.subr.mxu0 0.0
        %1044 = vmatpush2.msra.mxu0 0.0
        %1045 = vmatprep.subr.mxu0 0.0
        %1046 = vmatpush2.msra.mxu0 0.0
        %1047 = vmatprep.subr.mxu0 0.0
        %1048 = vmatpush2.msra.mxu0 0.0
        %1049 = vmatprep.subr.mxu0 0.0
        %1050 = vmatpush2.msra.mxu0 0.0
        %1051 = vmatprep.subr.mxu0 0.0
        %1052 = vmatpush2.msra.mxu0 0.0
        %1053 = vmatprep.subr.mxu0 0.0
        %1054 = vmatpush2.msra.mxu0 0.0
        %1055 = vmatprep.subr.mxu0 0.0
        %1056 = vmatpush2.msra.mxu0 0.0
        %1057 = vmatprep.subr.mxu0 0.0
        %1058 = vmatpush2.msra.mxu0 0.0
        %1059 = vmatprep.subr.mxu0 0.0
        %1060 = vmatpush2.msra.mxu0 0.0
        %1061 = vmatprep.subr.mxu0 0.0
        %1062 = vmatpush2.msra.mxu0 0.0
        %1063 = vmatprep.subr.mxu0 0.0
        %1064 = vmatpush2.msra.mxu0 0.0
        %1065 = vmatprep.subr.mxu0 0.0
        %1066 = vmatpush2.msra.mxu0 0.0
        %1067 = vmatprep.subr.mxu0 0.0
        %1068 = vmatpush2.msra.mxu0 0.0
        %1069 = vmatprep.subr.mxu0 0.0
        %1070 = vmatpush2.msra.mxu0 0.0
        %1071 = vmatprep.subr.mxu0 0.0
        %1072 = vmatpush2.msra.mxu0 0.0
        %1073 = vmatprep.mubr.f32.mxu0 0.0
        %1074 = vmatmul.mubr.f32.gmra.mxu0 %v962
        %v1075 = vpop.f32.mrf.mxu0
        %v1076 = vadd.f32 %v912, %v1075
        %v1077 = vpop.f32.mrf.mxu0
        %1078 = vmatprep.mubr.f32.mxu0 0.0
        %1079 = vmatmul.mubr.f32.gmra.mxu0 %v965
        %v1080 = vpop.f32.mrf.mxu0
        %v1081 = vadd.f32 %v913, %v1080
        %v1082 = vpop.f32.mrf.mxu0
        %1083 = vmatprep.mubr.f32.mxu0 0.0
        %1084 = vmatmul.mubr.f32.gmra.mxu0 %v968
        %v1085 = vpop.f32.mrf.mxu0
        %v1086 = vadd.f32 %v914, %v1085
        %v1087 = vpop.f32.mrf.mxu0
        %1088 = vmatprep.mubr.f32.mxu0 0.0
        %1089 = vmatmul.mubr.f32.gmra.mxu0 %v971
        %v1090 = vpop.f32.mrf.mxu0
        %v1091 = vadd.f32 %v915, %v1090
        %v1092 = vpop.f32.mrf.mxu0
        %1093 = vmatprep.mubr.f32.mxu0 0.0
        %1094 = vmatmul.mubr.f32.gmra.mxu0 %v974
        %v1095 = vpop.f32.mrf.mxu0
        %v1096 = vadd.f32 %v916, %v1095
        %v1097 = vpop.f32.mrf.mxu0
        %1098 = vmatprep.mubr.f32.mxu0 0.0
        %1099 = vmatmul.mubr.f32.gmra.mxu0 %v977
        %v1100 = vpop.f32.mrf.mxu0
        %v1101 = vadd.f32 %v917, %v1100
        %v1102 = vpop.f32.mrf.mxu0
        %1103 = vmatprep.mubr.f32.mxu0 0.0
        %1104 = vmatmul.mubr.f32.gmra.mxu0 %v980
        %v1105 = vpop.f32.mrf.mxu0
        %v1106 = vadd.f32 %v918, %v1105
        %v1107 = vpop.f32.mrf.mxu0
        %1108 = vmatprep.mubr.f32.mxu0 0.0
        %1109 = vmatmul.mubr.f32.gmra.mxu0 %v983
        %v1110 = vpop.f32.mrf.mxu0
        %v1111 = vadd.f32 %v919, %v1110
        %v1112 = vpop.f32.mrf.mxu0
        %1113 = vmatprep.mubr.f32.mxu0 0.0
        %1114 = vmatmul.mubr.f32.gmra.mxu0 %v986
        %v1115 = vpop.f32.mrf.mxu0
        %v1116 = vadd.f32 %v920, %v1115
        %v1117 = vpop.f32.mrf.mxu0
        %1118 = vmatprep.mubr.f32.mxu0 0.0
        %1119 = vmatmul.mubr.f32.gmra.mxu0 %v989
        %v1120 = vpop.f32.mrf.mxu0
        %v1121 = vadd.f32 %v921, %v1120
        %v1122 = vpop.f32.mrf.mxu0
        %1123 = vmatprep.mubr.f32.mxu0 0.0
        %1124 = vmatmul.mubr.f32.gmra.mxu0 %v992
        %v1125 = vpop.f32.mrf.mxu0
        %v1126 = vadd.f32 %v922, %v1125
        %v1127 = vpop.f32.mrf.mxu0
        %1128 = vmatprep.mubr.f32.mxu0 0.0
        %1129 = vmatmul.mubr.f32.gmra.mxu0 %v995
        %v1130 = vpop.f32.mrf.mxu0
        %v1131 = vadd.f32 %v923, %v1130
        %v1132 = vpop.f32.mrf.mxu0
        %1133 = vmatprep.mubr.f32.mxu0 0.0
        %1134 = vmatmul.mubr.f32.gmra.mxu0 %v998
        %v1135 = vpop.f32.mrf.mxu0
        %v1136 = vadd.f32 %v924, %v1135
        %v1137 = vpop.f32.mrf.mxu0
        %1138 = vmatprep.mubr.f32.mxu0 0.0
        %1139 = vmatmul.mubr.f32.gmra.mxu0 %v1001
        %v1140 = vpop.f32.mrf.mxu0
        %v1141 = vadd.f32 %v925, %v1140
        %v1142 = vpop.f32.mrf.mxu0
        %1143 = vmatprep.mubr.f32.mxu0 0.0
        %1144 = vmatmul.mubr.f32.gmra.mxu0 %v1004
        %v1145 = vpop.f32.mrf.mxu0
        %v1146 = vadd.f32 %v926, %v1145
        %v1147 = vpop.f32.mrf.mxu0
        %1148 = vmatprep.mubr.f32.mxu0 0.0
        %1149 = vmatmul.mubr.f32.gmra.mxu0 %v1007
        %v1150 = vpop.f32.mrf.mxu0
        %v1151 = vadd.f32 %v927, %v1150
        %v1152 = vpop.f32.mrf.mxu0
        %1153 = vdwg.mxu0
        %1154 = vmax.xlane.f32.xlu0 %v1076
        %v1155 = vpop.xlane.xlu0 %1154
        %1156 = vmax.xlane.f32.xlu0 %v1081
        %v1157 = vpop.xlane.xlu0 %1156
        %1158 = vmax.xlane.f32.xlu0 %v1086
        %v1159 = vpop.xlane.xlu0 %1158
        %1160 = vmax.xlane.f32.xlu0 %v1091
        %v1161 = vpop.xlane.xlu0 %1160
        %1162 = vmax.xlane.f32.xlu0 %v1096
        %v1163 = vpop.xlane.xlu0 %1162
        %1164 = vmax.xlane.f32.xlu0 %v1101
        %v1165 = vpop.xlane.xlu0 %1164
        %1166 = vmax.xlane.f32.xlu0 %v1106
        %v1167 = vpop.xlane.xlu0 %1166
        %1168 = vmax.xlane.f32.xlu0 %v1111
        %v1169 = vpop.xlane.xlu0 %1168
        %1170 = vmax.xlane.f32.xlu0 %v1116
        %v1171 = vpop.xlane.xlu0 %1170
        %1172 = vmax.xlane.f32.xlu0 %v1121
        %v1173 = vpop.xlane.xlu0 %1172
        %1174 = vmax.xlane.f32.xlu0 %v1126
        %v1175 = vpop.xlane.xlu0 %1174
        %1176 = vmax.xlane.f32.xlu0 %v1131
        %v1177 = vpop.xlane.xlu0 %1176
        %1178 = vmax.xlane.f32.xlu0 %v1136
        %v1179 = vpop.xlane.xlu0 %1178
        %1180 = vmax.xlane.f32.xlu0 %v1141
        %v1181 = vpop.xlane.xlu0 %1180
        %1182 = vmax.xlane.f32.xlu0 %v1146
        %v1183 = vpop.xlane.xlu0 %1182
        %1184 = vmax.xlane.f32.xlu0 %v1151
        %v1185 = vpop.xlane.xlu0 %1184
        %v1186 = vsub.f32 %v1076, %v1155
        %v1187 = vsub.f32 %v1081, %v1157
        %v1188 = vsub.f32 %v1086, %v1159
        %v1189 = vsub.f32 %v1091, %v1161
        %v1190 = vsub.f32 %v1096, %v1163
        %v1191 = vsub.f32 %v1101, %v1165
        %v1192 = vsub.f32 %v1106, %v1167
        %v1193 = vsub.f32 %v1111, %v1169
        %v1194 = vsub.f32 %v1116, %v1171
        %v1195 = vsub.f32 %v1121, %v1173
        %v1196 = vsub.f32 %v1126, %v1175
        %v1197 = vsub.f32 %v1131, %v1177
        %v1198 = vsub.f32 %v1136, %v1179
        %v1199 = vsub.f32 %v1141, %v1181
        %v1200 = vsub.f32 %v1146, %v1183
        %v1201 = vsub.f32 %v1151, %v1185
        %v1202 = vmul.f32 %v1186, 1.442695
        %v1203 = vpow.pop %v1202
        %v1204 = vmul.f32 %v1187, 1.442695
        %v1205 = vpow.pop %v1204
        %v1206 = vmul.f32 %v1188, 1.442695
        %v1207 = vpow.pop %v1206
        %v1208 = vmul.f32 %v1189, 1.442695
        %v1209 = vpow.pop %v1208
        %v1210 = vmul.f32 %v1190, 1.442695
        %v1211 = vpow.pop %v1210
        %v1212 = vmul.f32 %v1191, 1.442695
        %v1213 = vpow.pop %v1212
        %v1214 = vmul.f32 %v1192, 1.442695
        %v1215 = vpow.pop %v1214
        %v1216 = vmul.f32 %v1193, 1.442695
        %v1217 = vpow.pop %v1216
        %v1218 = vmul.f32 %v1194, 1.442695
        %v1219 = vpow.pop %v1218
        %v1220 = vmul.f32 %v1195, 1.442695
        %v1221 = vpow.pop %v1220
        %v1222 = vmul.f32 %v1196, 1.442695
        %v1223 = vpow.pop %v1222
        %v1224 = vmul.f32 %v1197, 1.442695
        %v1225 = vpow.pop %v1224
        %v1226 = vmul.f32 %v1198, 1.442695
        %v1227 = vpow.pop %v1226
        %v1228 = vmul.f32 %v1199, 1.442695
        %v1229 = vpow.pop %v1228
        %v1230 = vmul.f32 %v1200, 1.442695
        %v1231 = vpow.pop %v1230
        %v1232 = vmul.f32 %v1201, 1.442695
        %v1233 = vpow.pop %v1232
        %1234 = vadd.xlane.f32.xlu0 %v1203
        %v1235 = vpop.xlane.xlu0 %1234
        %1236 = vadd.xlane.f32.xlu0 %v1205
        %v1237 = vpop.xlane.xlu0 %1236
        %1238 = vadd.xlane.f32.xlu0 %v1207
        %v1239 = vpop.xlane.xlu0 %1238
        %1240 = vadd.xlane.f32.xlu0 %v1209
        %v1241 = vpop.xlane.xlu0 %1240
        %1242 = vadd.xlane.f32.xlu0 %v1211
        %v1243 = vpop.xlane.xlu0 %1242
        %1244 = vadd.xlane.f32.xlu0 %v1213
        %v1245 = vpop.xlane.xlu0 %1244
        %1246 = vadd.xlane.f32.xlu0 %v1215
        %v1247 = vpop.xlane.xlu0 %1246
        %1248 = vadd.xlane.f32.xlu0 %v1217
        %v1249 = vpop.xlane.xlu0 %1248
        %1250 = vadd.xlane.f32.xlu0 %v1219
        %v1251 = vpop.xlane.xlu0 %1250
        %1252 = vadd.xlane.f32.xlu0 %v1221
        %v1253 = vpop.xlane.xlu0 %1252
        %1254 = vadd.xlane.f32.xlu0 %v1223
        %v1255 = vpop.xlane.xlu0 %1254
        %1256 = vadd.xlane.f32.xlu0 %v1225
        %v1257 = vpop.xlane.xlu0 %1256
        %1258 = vadd.xlane.f32.xlu0 %v1227
        %v1259 = vpop.xlane.xlu0 %1258
        %1260 = vadd.xlane.f32.xlu0 %v1229
        %v1261 = vpop.xlane.xlu0 %1260
        %1262 = vadd.xlane.f32.xlu0 %v1231
        %v1263 = vpop.xlane.xlu0 %1262
        %1264 = vadd.xlane.f32.xlu0 %v1233
        %v1265 = vpop.xlane.xlu0 %1264
        %v1266 = vrcp.pop %v1235
        %v1267 = vrcp.pop %v1237
        %v1268 = vrcp.pop %v1239
        %v1269 = vrcp.pop %v1241
        %v1270 = vrcp.pop %v1243
        %v1271 = vrcp.pop %v1245
        %v1272 = vrcp.pop %v1247
        %v1273 = vrcp.pop %v1249
        %v1274 = vrcp.pop %v1251
        %v1275 = vrcp.pop %v1253
        %v1276 = vrcp.pop %v1255
        %v1277 = vrcp.pop %v1257
        %v1278 = vrcp.pop %v1259
        %v1279 = vrcp.pop %v1261
        %v1280 = vrcp.pop %v1263
        %v1281 = vrcp.pop %v1265
        %v1282 = vmul.f32 %v1235, %v1266
        %v1283 = vmul.f32 %v1237, %v1267
        %v1284 = vmul.f32 %v1239, %v1268
        %v1285 = vmul.f32 %v1241, %v1269
        %v1286 = vmul.f32 %v1243, %v1270
        %v1287 = vmul.f32 %v1245, %v1271
        %v1288 = vmul.f32 %v1247, %v1272
        %v1289 = vmul.f32 %v1249, %v1273
        %v1290 = vmul.f32 %v1251, %v1274
        %v1291 = vmul.f32 %v1253, %v1275
        %v1292 = vmul.f32 %v1255, %v1276
        %v1293 = vmul.f32 %v1257, %v1277
        %v1294 = vmul.f32 %v1259, %v1278
        %v1295 = vmul.f32 %v1261, %v1279
        %v1296 = vmul.f32 %v1263, %v1280
        %v1297 = vmul.f32 %v1265, %v1281
        %v1298 = vsub.f32 2.0, %v1282
        %v1299 = vsub.f32 2.0, %v1283
        %v1300 = vsub.f32 2.0, %v1284
        %v1301 = vsub.f32 2.0, %v1285
        %v1302 = vsub.f32 2.0, %v1286
        %v1303 = vsub.f32 2.0, %v1287
        %v1304 = vsub.f32 2.0, %v1288
        %v1305 = vsub.f32 2.0, %v1289
        %v1306 = vsub.f32 2.0, %v1290
        %v1307 = vsub.f32 2.0, %v1291
        %v1308 = vsub.f32 2.0, %v1292
        %v1309 = vsub.f32 2.0, %v1293
        %v1310 = vsub.f32 2.0, %v1294
        %v1311 = vsub.f32 2.0, %v1295
        %v1312 = vsub.f32 2.0, %v1296
        %v1313 = vsub.f32 2.0, %v1297
        %v1314 = vmul.f32 %v1266, %v1298
        %v1315 = vmul.f32 %v1267, %v1299
        %v1316 = vmul.f32 %v1268, %v1300
        %v1317 = vmul.f32 %v1269, %v1301
        %v1318 = vmul.f32 %v1270, %v1302
        %v1319 = vmul.f32 %v1271, %v1303
        %v1320 = vmul.f32 %v1272, %v1304
        %v1321 = vmul.f32 %v1273, %v1305
        %v1322 = vmul.f32 %v1274, %v1306
        %v1323 = vmul.f32 %v1275, %v1307
        %v1324 = vmul.f32 %v1276, %v1308
        %v1325 = vmul.f32 %v1277, %v1309
        %v1326 = vmul.f32 %v1278, %v1310
        %v1327 = vmul.f32 %v1279, %v1311
        %v1328 = vmul.f32 %v1280, %v1312
        %v1329 = vmul.f32 %v1281, %v1313
        %v1330 = vmul.f32 %v1203, %v1314
        %v1331 = vmul.f32 %v1205, %v1315
        %v1332 = vmul.f32 %v1207, %v1316
        %v1333 = vmul.f32 %v1209, %v1317
        %v1334 = vmul.f32 %v1211, %v1318
        %v1335 = vmul.f32 %v1213, %v1319
        %v1336 = vmul.f32 %v1215, %v1320
        %v1337 = vmul.f32 %v1217, %v1321
        %v1338 = vmul.f32 %v1219, %v1322
        %v1339 = vmul.f32 %v1221, %v1323
        %v1340 = vmul.f32 %v1223, %v1324
        %v1341 = vmul.f32 %v1225, %v1325
        %v1342 = vmul.f32 %v1227, %v1326
        %v1343 = vmul.f32 %v1229, %v1327
        %v1344 = vmul.f32 %v1231, %v1328
        %v1345 = vmul.f32 %v1233, %v1329
        %1346 = vmatprep.subr.mxu0 0.0
        %1347 = vmatpush1.xpose.msra.mxu0 %v1345
        %1348 = vmatprep.subr.mxu0 0.0
        %1349 = vmatpush1.xpose.msra.mxu0 %v1344
        %1350 = vmatprep.subr.mxu0 0.0
        %1351 = vmatpush1.xpose.msra.mxu0 %v1343
        %1352 = vmatprep.subr.mxu0 0.0
        %1353 = vmatpush1.xpose.msra.mxu0 %v1342
        %1354 = vmatprep.subr.mxu0 0.0
        %1355 = vmatpush1.xpose.msra.mxu0 %v1341
        %1356 = vmatprep.subr.mxu0 0.0
        %1357 = vmatpush1.xpose.msra.mxu0 %v1340
        %1358 = vmatprep.subr.mxu0 0.0
        %1359 = vmatpush1.xpose.msra.mxu0 %v1339
        %1360 = vmatprep.subr.mxu0 0.0
        %1361 = vmatpush1.xpose.msra.mxu0 %v1338
        %1362 = vmatprep.subr.mxu0 0.0
        %1363 = vmatpush1.xpose.msra.mxu0 %v1337
        %1364 = vmatprep.subr.mxu0 0.0
        %1365 = vmatpush1.xpose.msra.mxu0 %v1336
        %1366 = vmatprep.subr.mxu0 0.0
        %1367 = vmatpush1.xpose.msra.mxu0 %v1335
        %1368 = vmatprep.subr.mxu0 0.0
        %1369 = vmatpush1.xpose.msra.mxu0 %v1334
        %1370 = vmatprep.subr.mxu0 0.0
        %1371 = vmatpush1.xpose.msra.mxu0 %v1333
        %1372 = vmatprep.subr.mxu0 0.0
        %1373 = vmatpush1.xpose.msra.mxu0 %v1332
        %1374 = vmatprep.subr.mxu0 0.0
        %1375 = vmatpush1.xpose.msra.mxu0 %v1331
        %1376 = vmatprep.subr.mxu0 0.0
        %1377 = vmatpush1.xpose.msra.mxu0 %v1330
        %1378 = vmatprep.subr.mxu0 0.0
        %1379 = vmatpush2.xpose.msra.mxu0 0.0
        %1380 = vmatprep.subr.mxu0 0.0
        %1381 = vmatpush2.xpose.msra.mxu0 0.0
        %1382 = vmatprep.subr.mxu0 0.0
        %1383 = vmatpush2.xpose.msra.mxu0 0.0
        %1384 = vmatprep.subr.mxu0 0.0
        %1385 = vmatpush2.xpose.msra.mxu0 0.0
        %1386 = vmatprep.subr.mxu0 0.0
        %1387 = vmatpush2.xpose.msra.mxu0 0.0
        %1388 = vmatprep.subr.mxu0 0.0
        %1389 = vmatpush2.xpose.msra.mxu0 0.0
        %1390 = vmatprep.subr.mxu0 0.0
        %1391 = vmatpush2.xpose.msra.mxu0 0.0
        %1392 = vmatprep.subr.mxu0 0.0
        %1393 = vmatpush2.xpose.msra.mxu0 0.0
        %1394 = vmatprep.subr.mxu0 0.0
        %1395 = vmatpush2.xpose.msra.mxu0 0.0
        %1396 = vmatprep.subr.mxu0 0.0
        %1397 = vmatpush2.xpose.msra.mxu0 0.0
        %1398 = vmatprep.subr.mxu0 0.0
        %1399 = vmatpush2.xpose.msra.mxu0 0.0
        %1400 = vmatprep.subr.mxu0 0.0
        %1401 = vmatpush2.xpose.msra.mxu0 0.0
        %1402 = vmatprep.subr.mxu0 0.0
        %1403 = vmatpush2.xpose.msra.mxu0 0.0
        %1404 = vmatprep.subr.mxu0 0.0
        %1405 = vmatpush2.xpose.msra.mxu0 0.0
        %1406 = vmatprep.subr.mxu0 0.0
        %1407 = vmatpush2.xpose.msra.mxu0 0.0
        %1408 = vmatprep.subr.mxu0 0.0
        %1409 = vmatpush2.xpose.msra.mxu0 0.0
        %1410 = vmatprep.mubr.f32.mxu0 0.0
        %1411 = vmatmul.mubr.f32.gmra.mxu0 %v874
        %v1412 = vpop.f32.mrf.mxu0
        %v1413 = vadd.f32 0.0, %v1412
        %v1414 = vpop.f32.mrf.mxu0
        %1415 = vmatprep.mubr.f32.mxu0 0.0
        %1416 = vmatmul.mubr.f32.gmra.mxu0 %v879
        %v1417 = vpop.f32.mrf.mxu0
        %v1418 = vadd.f32 0.0, %v1417
        %v1419 = vpop.f32.mrf.mxu0
        %1420 = vmatprep.mubr.f32.mxu0 0.0
        %1421 = vmatmul.mubr.f32.gmra.mxu0 %v884
        %v1422 = vpop.f32.mrf.mxu0
        %v1423 = vadd.f32 0.0, %v1422
        %v1424 = vpop.f32.mrf.mxu0
        %1425 = vmatprep.mubr.f32.mxu0 0.0
        %1426 = vmatmul.mubr.f32.gmra.mxu0 %v889
        %v1427 = vpop.f32.mrf.mxu0
        %v1428 = vadd.f32 0.0, %v1427
        %v1429 = vpop.f32.mrf.mxu0
        %1430 = vmatprep.mubr.f32.mxu0 0.0
        %1431 = vmatmul.mubr.f32.gmra.mxu0 %v894
        %v1432 = vpop.f32.mrf.mxu0
        %v1433 = vadd.f32 0.0, %v1432
        %v1434 = vpop.f32.mrf.mxu0
        %1435 = vmatprep.mubr.f32.mxu0 0.0
        %1436 = vmatmul.mubr.f32.gmra.mxu0 %v899
        %v1437 = vpop.f32.mrf.mxu0
        %v1438 = vadd.f32 0.0, %v1437
        %v1439 = vpop.f32.mrf.mxu0
        %1440 = vmatprep.mubr.f32.mxu0 0.0
        %1441 = vmatmul.mubr.f32.gmra.mxu0 %v904
        %v1442 = vpop.f32.mrf.mxu0
        %v1443 = vadd.f32 0.0, %v1442
        %v1444 = vpop.f32.mrf.mxu0
        %1445 = vmatprep.mubr.f32.mxu0 0.0
        %1446 = vmatmul.mubr.f32.gmra.mxu0 %v909
        %v1447 = vpop.f32.mrf.mxu0
        %v1448 = vadd.f32 0.0, %v1447
        %v1449 = vpop.f32.mrf.mxu0
        %1450 = vdwg.mxu0
        %s1451 = sld [smem:[#allocation2]]
        %v1452 = vstv %s1451
        %v1453 = vmul.f32 %v1452, %v1413
        %v1454 = vmul.f32 %v1452, %v1418
        %v1455 = vmul.f32 %v1452, %v1423
        %v1456 = vmul.f32 %v1452, %v1428
        %v1457 = vmul.f32 %v1452, %v1433
        %v1458 = vmul.f32 %v1452, %v1438
        %v1459 = vmul.f32 %v1452, %v1443
        %v1460 = vmul.f32 %v1452, %v1448
        %v1461 = vadd.f32 %v1453, %v448
        %v1462 = vadd.f32 %v1454, %v449
        %v1463 = vadd.f32 %v1455, %v450
        %v1464 = vadd.f32 %v1456, %v451
        %v1465 = vadd.f32 %v1457, %v452
        %v1466 = vadd.f32 %v1458, %v453
        %v1467 = vadd.f32 %v1459, %v454
        %v1468 = vadd.f32 %v1460, %v455
        %1469 = vst [vmem:[%s433] sm:$0xff] %v1461
        %1470 = vst [vmem:[%s433 + $0x8] sm:$0xff] %v1462
        %1471 = vst [vmem:[%s433 + $0x10] sm:$0xff] %v1463
        %1472 = vst [vmem:[%s433 + $0x18] sm:$0xff] %v1464
        %1473 = vst [vmem:[%s433 + $0x20] sm:$0xff] %v1465
        %1474 = vst [vmem:[%s433 + $0x28] sm:$0xff] %v1466
        %1475 = vst [vmem:[%s433 + $0x30] sm:$0xff] %v1467
        %1476 = vst [vmem:[%s433 + $0x38] sm:$0xff] %v1468
        %s1477 = sand.u32 %s278, 1
        %s1478 = scalar_lea.sflag [#allocation5], %s1477
        %s1479 = sand.u32 %s278, 1
        %s1480 = smul.addr %s1479, 64
        %s1481 = scalar_lea.vmem [#allocation8], %s1480
        // Predicated region
        $region69: #{tpu_custom_call.1} parent=59 // pred_check
          %p1482 = pneg %p288
        $region70: #{tpu_custom_call.1} parent=59 // pred_check_branch
          %1484 = sbr.rel (%p1482) target = $region72
        $region71: #{tpu_custom_call.1} parent=59 // pred_region
          %s1486 = ssub.s32 1024, 1024
          %1487 = vsyncadd %s1478, %s1486
          %s1488 = smul.addr %s33, 8
          %s1489 = sadd.s32 %s34, %s1488
          %s1490 = smul.addr %s1489, 128
          %s1491 = scalar_lea.hbm %s10, %s1490
          %s1492 = sshll.u32 %s1481, 4
          %s1493 = int_to_ptr.vmem [resolvable:$true] %s1492
          %1498 = dma.vmem_to_hbm [thread:$0]  %s1493, 1024, %s1491, %s1478, 128, 128, 8
        $region72: #{tpu_custom_call.1} parent=59 // pred_fallthru
          _
      $region60: #{tpu_custom_call.1} parent=5 // pred_fallthru
        _
      %p1499 = scmp.le.s32.totalorder 2, %s24
      // Predicated region
      $region73: #{tpu_custom_call.1} parent=5 // pred_check
        %p1500 = pneg %p1499
      $region74: #{tpu_custom_call.1} parent=5 // pred_check_branch
        %1502 = sbr.rel (%p1500) target = $region76
      $region75: #{tpu_custom_call.1} parent=5 // pred_region
        %s1503 = ssub.s32 %s24, 2
        // Predicated region
        $region77: #{tpu_custom_call.1} parent=75 // pred_check
          %p1504 = pneg %p294
        $region78: #{tpu_custom_call.1} parent=75 // pred_check_branch
          %1506 = sbr.rel (%p1504) target = $region80
        $region79: #{tpu_custom_call.1} parent=75 // pred_region
          %s1507 = sand.u32 %s279, 1
          %s1508 = scalar_lea.sflag [#allocation5], %s1507
          %s1509 = sand.u32 %s279, 1
          %s1510 = smul.addr %s1509, 64
          %s1511 = scalar_lea.vmem [#allocation8], %s1510
          %1512 = dma.done %s1508, 1024
        $region80: #{tpu_custom_call.1} parent=75 // pred_fallthru
          _
      $region76: #{tpu_custom_call.1} parent=5 // pred_fallthru
        _
    $region6: #{tpu_custom_call.1} parent=1 // loop_footer
      %s28 = sadd.s32 1, %s24
    $region7: #{tpu_custom_call.1} parent=1 // loop_footer_branch
      %23 = sbr.rel target = $region3
    $region8: #{tpu_custom_call.1} parent=1 // loop_exit
      _
    %1513 = vsyncpa [#allocation4], 1
    %s1514 = scalar_lea.sflag [#allocation4], 1
    %1515 = vsyncpa %s1514, 1
    %1516 = vsyncpa [#allocation7], 1
    %1517 = vsyncpa [#allocation5], 1
    %s1518 = scalar_lea.sflag [#allocation5], 1
    %1519 = vsyncpa %s1518, 1

</llo_original>
